<compile_context>
chip_gen: v7x
topology: tpu7x:2x2x1
jax: 0.10.0
libtpu: 0.0.40
codegen_flags: <defaults>
</compile_context>

<pallas_src>
from functools import partial

import jax
import jax.numpy as jnp
import numpy as np
from jax.experimental import pallas as pl
from jax.experimental.pallas import tpu as pltpu

NUM_NOTES = 128
SUBLANE = 8      # f32 sublane tile
LANE = 128       # lane tile


def _round_up(v, m):
    return (v + m - 1) // m * m


def _bilstm_fused_kernel(x_ref, wih_ref, whh_ref, b_ref, out_ref, xp_ref):
    """Fused forward+backward LSTM recurrence (single kernel invocation).

    x_ref   : (T*BP, N)       bf16, time-major, batch padded to BP
    wih_ref : (N, 2*G)        bf16, cols [0:G] fwd W_ih, [G:2G] bwd W_ih (gate-lane-aligned)
    whh_ref : (2*HP, G)       bf16, rows [0:HP] fwd W_hh, [HP:2HP] bwd W_hh
    b_ref   : (1, 2*G)        f32, [b_fwd | b_bwd], b = b_ih + b_hh
    out_ref : (2*BP, HP)      f32, rows [0:BP] fwd final h, rows [BP:2BP] bwd final h
    xp_ref  : (T*BP, 2*G)     f32 VMEM scratch (hoisted input projection + bias, both dirs)
    """
    TB = x_ref.shape[0]
    G2 = xp_ref.shape[-1]
    G = G2 // 2                       # 4 * HP
    HP = G // 4
    BP2 = out_ref.shape[0]
    BP = BP2 // 2
    T = TB // BP

    # ---- Hoisted input projection for BOTH directions: one MXU pass, bias folded in. ----
    xp_ref[...] = (
        jnp.dot(x_ref[...], wih_ref[...], preferred_element_type=jnp.float32)
        + b_ref[...]
    )

    whh = whh_ref[...]                # (2*HP, G) bf16, resident in VMEM

    # Block-diagonal row masks (hoisted out of the loop): forward rows use columns
    # [0:HP] of the widened h, backward rows use columns [HP:2HP].
    row = jax.lax.broadcasted_iota(jnp.int32, (BP2, HP), 0)
    fmask = (row < BP).astype(jnp.float32)        # (2*BP, HP)
    bmask = 1.0 - fmask

    def sig(v):
        # sigmoid via tanh: one EUP push instead of exp + divide on the serial path.
        return 0.5 * jnp.tanh(0.5 * v) + 0.5

    def step(t, carry):
        h, c = carry                              # f32, (2*BP, HP) each
        rf = pl.multiple_of(t * BP, BP)           # forward rows read time t
        rb = pl.multiple_of((T - 1 - t) * BP, BP)  # backward rows read time T-1-t
        g_f = xp_ref[pl.ds(rf, BP), 0:G]          # (BP, G) fwd-direction projection
        g_b = xp_ref[pl.ds(rb, BP), G:2 * G]      # (BP, G) bwd-direction projection
        xp_t = jnp.concatenate([g_f, g_b], axis=0)            # (2*BP, G)

        # Block-diagonal widened state: fwd rows -> [h_f | 0], bwd rows -> [0 | h_b],
        # so ONE (2*BP, 2*HP) @ (2*HP, G) matmul applies the right W_hh per direction.
        h_wide = jnp.concatenate([h * fmask, h * bmask], axis=1)  # (2*BP, 2*HP)
        gates = xp_t + jnp.dot(h_wide.astype(whh.dtype), whh,
                               preferred_element_type=jnp.float32)

        # Lane-aligned 128-wide gate blocks (PyTorch order [i, f, g, o]).
        i = sig(gates[:, 0 * HP:1 * HP])
        f = sig(gates[:, 1 * HP:2 * HP])
        g = jnp.tanh(gates[:, 2 * HP:3 * HP])
        o = sig(gates[:, 3 * HP:4 * HP])
        c_new = f * c + i * g
        h_new = o * jnp.tanh(c_new)
        return h_new, c_new

    h0 = jnp.zeros((BP2, HP), jnp.float32)
    c0 = jnp.zeros((BP2, HP), jnp.float32)
    unroll = T if T <= 16 else 8                  # bounded unroll for long sequences
    h_last, _ = jax.lax.fori_loop(0, T, step, (h0, c0), unroll=unroll)

    out_ref[...] = h_last                         # lane-dense (2*BP, 128) unmasked store


def init_params(key, hidden_size):
    """Deterministic init matching nn.LSTM parameter shapes, uniform(-1/sqrt(H), 1/sqrt(H))."""
    H = hidden_size
    bound = 1.0 / np.sqrt(H)
    ks = jax.random.split(key, 8)
    u = lambda k, shape: jax.random.uniform(k, shape, jnp.float32, -bound, bound)
    # PyTorch shapes: weight_ih (4H, N), weight_hh (4H, H), biases (4H,); fwd then reverse.
    wih_f = u(ks[0], (4 * H, NUM_NOTES))
    whh_f = u(ks[1], (4 * H, H))
    bih_f = u(ks[2], (4 * H,))
    bhh_f = u(ks[3], (4 * H,))
    wih_b = u(ks[4], (4 * H, NUM_NOTES))
    whh_b = u(ks[5], (4 * H, H))
    bih_b = u(ks[6], (4 * H,))
    bhh_b = u(ks[7], (4 * H,))
    return (wih_f, whh_f, bih_f, bhh_f, wih_b, whh_b, bih_b, bhh_b)


def pack_params(params, hidden_size):
    """PyTorch-shaped params -> fused, gate-lane-aligned, bf16 kernel params.

    Returns:
      wih_cat : (N, 2*G)  bf16 — fwd W_ih in cols [0:G], bwd in [G:2G]
      whh_cat : (2*HP, G) bf16 — fwd W_hh in rows [0:HP], bwd in [HP:2HP]
      b_cat   : (1, 2*G)  f32  — [b_ih+b_hh fwd | bwd]
    """
    (wih_f, whh_f, bih_f, bhh_f, wih_b, whh_b, bih_b, bhh_b) = params
    H = hidden_size
    HP = _round_up(max(H, LANE), LANE)            # each gate padded to a lane-aligned block
    G = 4 * HP
    N = wih_f.shape[1]

    def pack_dir(w_ih, w_hh, b_ih, b_hh):
        wih_p = jnp.zeros((N, G), jnp.float32)
        whh_p = jnp.zeros((HP, G), jnp.float32)
        b_p = jnp.zeros((G,), jnp.float32)
        b = b_ih + b_hh
        for g in range(4):                        # PyTorch gate order [i, f, g, o]
            wih_p = wih_p.at[:, g * HP:g * HP + H].set(w_ih[g * H:(g + 1) * H, :].T)
            whh_p = whh_p.at[:H, g * HP:g * HP + H].set(w_hh[g * H:(g + 1) * H, :].T)
            b_p = b_p.at[g * HP:g * HP + H].set(b[g * H:(g + 1) * H])
        return wih_p, whh_p, b_p

    wf, hf, bf = pack_dir(wih_f, whh_f, bih_f, bhh_f)
    wb, hb, bb = pack_dir(wih_b, whh_b, bih_b, bhh_b)
    wih_cat = jnp.concatenate([wf, wb], axis=1).astype(jnp.bfloat16)   # (N, 2*G)
    whh_cat = jnp.concatenate([hf, hb], axis=0).astype(jnp.bfloat16)   # (2*HP, G)
    b_cat = jnp.concatenate([bf, bb], axis=0)[None, :]                 # (1, 2*G) f32
    return wih_cat, whh_cat, b_cat


@partial(jax.jit, static_argnames=("hidden_size",))
def midi_encoder_forward(x, wih_cat, whh_cat, b_cat, *, hidden_size):
    """x: (B, T, NUM_NOTES) float32 (PyTorch batch_first). Returns (B, 2H) float32."""
    B, T, N = x.shape
    H = hidden_size
    assert N == NUM_NOTES
    HP = whh_cat.shape[0] // 2
    G = whh_cat.shape[1]
    assert G == 4 * HP and wih_cat.shape == (N, 2 * G) and b_cat.shape == (1, 2 * G)
    BP = _round_up(max(B, SUBLANE), SUBLANE)
    # NOTE: throughput scales nearly linearly with batch up to the MXU row width at
    # essentially no extra recurrence latency — batch many sequences per call upstream.

    # Lean prep (fused under jit): cast -> time-major transpose -> pad batch -> flatten.
    x_tm = jnp.transpose(x.astype(jnp.bfloat16), (1, 0, 2))            # (T, B, N) bf16
    x_pad = jnp.pad(x_tm, ((0, 0), (0, BP - B), (0, 0)))               # (T, BP, N)
    x_flat = x_pad.reshape(T * BP, N)                                  # (T*BP, N)

    # Explicit VMEM budget: xp slab + double-buffered x/out blocks + weights.
    est = (
        2 * (T * BP) * N * 2                 # x block, bf16, double-buffered
        + N * (2 * G) * 2                    # W_ih (both dirs), bf16
        + (2 * HP) * G * 2                   # W_hh (both dirs), bf16
        + (2 * G) * 4                        # bias, f32
        + 2 * (2 * BP) * HP * 4              # out block, f32, double-buffered
        + (T * BP) * (2 * G) * 4             # xp scratch slab, f32
    )
    vmem_limit = int(min(max(est + est // 4 + (4 << 20), 32 << 20), 100 << 20))

    grid_spec = pltpu.PrefetchScalarGridSpec(
        num_scalar_prefetch=0,
        grid=(1,),                                               # directions fused: no dir axis
        in_specs=[
            pl.BlockSpec((T * BP, N), lambda i: (0, 0)),         # x, loaded once
            pl.BlockSpec((N, 2 * G), lambda i: (0, 0)),          # W_ih both dirs
            pl.BlockSpec((2 * HP, G), lambda i: (0, 0)),         # W_hh both dirs (K-concat)
            pl.BlockSpec((1, 2 * G), lambda i: (0, 0)),          # bias both dirs
        ],
        out_specs=pl.BlockSpec((2 * BP, HP), lambda i: (0, 0)),  # fwd rows then bwd rows
        scratch_shapes=[pltpu.VMEM((T * BP, 2 * G), jnp.float32)],
    )

    out_padded = pl.pallas_call(
        _bilstm_fused_kernel,
        out_shape=jax.ShapeDtypeStruct((2 * BP, HP), jnp.float32),
        grid_spec=grid_spec,
        compiler_params=pltpu.CompilerParams(
            dimension_semantics=("arbitrary",),
            vmem_limit_bytes=vmem_limit,
        ),
    )(x_flat, wih_cat, whh_cat, b_cat)

    fwd_last = out_padded[:B, :H]               # == out[:, T-1, :H]
    bwd_last = out_padded[BP:BP + B, :H]        # == out[:, 0, H:]
    return jnp.concatenate([fwd_last, bwd_last], axis=1)


def reference_forward(x, params, hidden_size, mirror_kernel):
    """Pure-JAX reference of the PyTorch bidirectional LSTM + slicing.

    mirror_kernel=True mirrors the kernel numerics exactly: bf16 matmul operands
    (f32 accumulate/state) and the tanh-form sigmoid.
    """
    (wih_f, whh_f, bih_f, bhh_f, wih_b, whh_b, bih_b, bhh_b) = params
    B, T, N = x.shape
    H = hidden_size

    def q(a):
        return a.astype(jnp.bfloat16).astype(jnp.float32) if mirror_kernel else a

    def sig(v):
        if mirror_kernel:
            return 0.5 * jnp.tanh(0.5 * v) + 0.5
        return jax.nn.sigmoid(v)

    xq = q(x)

    def run_dir(w_ih, w_hh, b_ih, b_hh, reverse):
        wih = q(w_ih.T)
        whh = q(w_hh.T)
        b = (b_ih + b_hh)[None, :]
        h = jnp.zeros((B, H), jnp.float32)
        c = jnp.zeros((B, H), jnp.float32)
        order = range(T - 1, -1, -1) if reverse else range(T)
        for t in order:
            g = xq[:, t, :] @ wih + q(h) @ whh + b
            i = sig(g[:, :H])
            f = sig(g[:, H:2 * H])
            gg = jnp.tanh(g[:, 2 * H:3 * H])
            o = sig(g[:, 3 * H:])
            c = f * c + i * gg
            h = o * jnp.tanh(c)
        return h

    fwd = run_dir(wih_f, whh_f, bih_f, bhh_f, reverse=False)   # == out[:, T-1, :H]
    bwd = run_dir(wih_b, whh_b, bih_b, bhh_b, reverse=True)    # == out[:, 0, H:]
    return jnp.concatenate([fwd, bwd], axis=1)


if __name__ == "__main__":
    batch = 2
    sequence_length = 8
    hidden_size = 32

    key = jax.random.PRNGKey(0)
    k_x, k_p = jax.random.split(key)
    x = jax.random.normal(k_x, (batch, sequence_length, NUM_NOTES), jnp.float32)
    params = init_params(k_p, hidden_size)
    wih_cat, whh_cat, b_cat = pack_params(params, hidden_size)

    out = midi_encoder_forward(x, wih_cat, whh_cat, b_cat, hidden_size=hidden_size)
    out = jax.block_until_ready(out)
    assert out.shape == (batch, 2 * hidden_size)

    # Tight check: reference mirroring the kernel's bf16-operand / f32-accumulate /
    # tanh-form-sigmoid numerics.
    ref_q = reference_forward(x, params, hidden_size, mirror_kernel=True)
    np.testing.assert_allclose(np.asarray(out), np.asarray(ref_q), rtol=2e-3, atol=2e-3)

    # Loose sanity check vs the exact-f32 PyTorch-equivalent forward (deviations are
    # bf16 matmul operands and the tanh-form sigmoid, both tiny).
    ref_f32 = reference_forward(x, params, hidden_size, mirror_kernel=False)
    np.testing.assert_allclose(np.asarray(out), np.asarray(ref_f32), rtol=0, atol=1e-1)

    print("KERNEL_OK")
</pallas_src>

<mosaic_0001>
module attributes {stable_mosaic.version = 11 : i64} {
  func.func @_bilstm_fused_kernel(%arg0: i32, %arg1: memref<64x128xbf16, #tpu.memory_space<vmem>>, %arg2: memref<128x1024xbf16, #tpu.memory_space<vmem>>, %arg3: memref<256x512xbf16, #tpu.memory_space<vmem>>, %arg4: memref<1x1024xf32, #tpu.memory_space<vmem>>, %arg5: memref<16x128xf32, #tpu.memory_space<vmem>>, %arg6: memref<64x1024xf32, #tpu.memory_space<vmem>>) attributes {dimension_semantics = [#tpu.dimension_semantics<arbitrary>], iteration_bounds = array<i64: 1>, scalar_prefetch = 0 : i64, scratch_operands = 1 : i64, tpu.core_type = #tpu.core_type<tc>, window_params = [{pipeline_mode = #tpu.pipeline_mode<synchronous>, transform_indices = @transform_0, window_bounds = array<i64: 64, 128>}, {pipeline_mode = #tpu.pipeline_mode<synchronous>, transform_indices = @transform_1, window_bounds = array<i64: 128, 1024>}, {pipeline_mode = #tpu.pipeline_mode<synchronous>, transform_indices = @transform_2, window_bounds = array<i64: 256, 512>}, {pipeline_mode = #tpu.pipeline_mode<synchronous>, transform_indices = @transform_3, window_bounds = array<i64: 1, 1024>}, {pipeline_mode = #tpu.pipeline_mode<synchronous>, transform_indices = @transform_4, window_bounds = array<i64: 16, 128>}]} {
    %c0 = arith.constant 0 : index
    %c0_0 = arith.constant 0 : index
    %0 = vector.load %arg1[%c0, %c0_0] : memref<64x128xbf16, #tpu.memory_space<vmem>>, vector<64x128xbf16>
    %c0_1 = arith.constant 0 : index
    %c0_2 = arith.constant 0 : index
    %1 = vector.load %arg2[%c0_1, %c0_2] : memref<128x1024xbf16, #tpu.memory_space<vmem>>, vector<128x1024xbf16>
    %cst = arith.constant dense<0.000000e+00> : vector<64x1024xf32>
    %2 = tpu.matmul %0, %1, %cst {dimension_numbers = #tpu.dot_dimension_numbers<[1], [0], [0], [1], [0, 0, 1, 1], [], []>} : vector<64x128xbf16>, vector<128x1024xbf16>, vector<64x1024xf32> -> vector<64x1024xf32>
    %c0_3 = arith.constant 0 : index
    %c0_4 = arith.constant 0 : index
    %3 = vector.load %arg4[%c0_3, %c0_4] : memref<1x1024xf32, #tpu.memory_space<vmem>>, vector<1x1024xf32>
    %4 = vector.broadcast %3 : vector<1x1024xf32> to vector<64x1024xf32>
    %5 = arith.addf %2, %4 : vector<64x1024xf32>
    %c0_5 = arith.constant 0 : index
    %c0_6 = arith.constant 0 : index
    %6 = vector.load %arg6[%c0_5, %c0_6] : memref<64x1024xf32, #tpu.memory_space<vmem>>, vector<64x1024xf32>
    tpu.vector_store %arg6[%c0_5, %c0_6], %5 {strides = array<i32>} : memref<64x1024xf32, #tpu.memory_space<vmem>>, vector<64x1024xf32>,
    %c0_7 = arith.constant 0 : index
    %c0_8 = arith.constant 0 : index
    %7 = vector.load %arg3[%c0_7, %c0_8] : memref<256x512xbf16, #tpu.memory_space<vmem>>, vector<256x512xbf16>
    %8 = tpu.iota {dimensions = array<i32: 0>} : vector<16x128xi32>
    %c8_i32 = arith.constant 8 : i32
    %9 = vector.broadcast %c8_i32 : i32 to vector<16x128xi32>
    %10 = arith.cmpi slt, %8, %9 : vector<16x128xi32>
    %11 = arith.extui %10 : vector<16x128xi1> to vector<16x128xi32>
    %12 = arith.sitofp %11 : vector<16x128xi32> to vector<16x128xf32>
    %cst_9 = arith.constant 1.000000e+00 : f32
    %13 = vector.broadcast %cst_9 : f32 to vector<16x128xf32>
    %14 = arith.subf %13, %12 : vector<16x128xf32>
    %cst_10 = arith.constant 0.000000e+00 : f32
    %15 = vector.broadcast %cst_10 : f32 to vector<16x128xf32>
    %cst_11 = arith.constant 0.000000e+00 : f32
    %16 = vector.broadcast %cst_11 : f32 to vector<16x128xf32>
    %c0_i32 = arith.constant 0 : i32
    %c8_i32_12 = arith.constant 8 : i32
    %17 = arith.muli %c0_i32, %c8_i32_12 : i32
    %18 = tpu.assume_multiple %17, 8 : i32
    %c7_i32 = arith.constant 7 : i32
    %19 = arith.subi %c7_i32, %c0_i32 : i32
    %c8_i32_13 = arith.constant 8 : i32
    %20 = arith.muli %19, %c8_i32_13 : i32
    %21 = tpu.assume_multiple %20, 8 : i32
    %22 = arith.index_cast %18 : i32 to index
    %c0_14 = arith.constant 0 : index
    %23 = vector.load %arg6[%22, %c0_14] : memref<64x1024xf32, #tpu.memory_space<vmem>>, vector<8x512xf32>
    %24 = arith.index_cast %21 : i32 to index
    %c512 = arith.constant 512 : index
    %25 = vector.load %arg6[%24, %c512] : memref<64x1024xf32, #tpu.memory_space<vmem>>, vector<8x512xf32>
    %26 = tpu.concatenate %23, %25 in 0 : vector<8x512xf32>, vector<8x512xf32> -> vector<16x512xf32>
    %27 = arith.mulf %15, %12 : vector<16x128xf32>
    %28 = arith.mulf %15, %14 : vector<16x128xf32>
    %29 = tpu.concatenate %27, %28 in 1 : vector<16x128xf32>, vector<16x128xf32> -> vector<16x256xf32>
    %30 = arith.truncf %29 : vector<16x256xf32> to vector<16x256xbf16>
    %cst_15 = arith.constant dense<0.000000e+00> : vector<16x512xf32>
    %31 = tpu.matmul %30, %7, %cst_15 {dimension_numbers = #tpu.dot_dimension_numbers<[1], [0], [0], [1], [0, 0, 1, 1], [], []>} : vector<16x256xbf16>, vector<256x512xbf16>, vector<16x512xf32> -> vector<16x512xf32>
    %32 = arith.addf %26, %31 : vector<16x512xf32>
    %33 = vector.extract_strided_slice %32 {offsets = [0, 0], sizes = [16, 128], strides = [1, 1]} : vector<16x512xf32> to vector<16x128xf32>
    %cst_16 = arith.constant 5.000000e-01 : f32
    %34 = vector.broadcast %cst_16 : f32 to vector<16x128xf32>
    %35 = arith.mulf %34, %33 : vector<16x128xf32>
    %36 = math.tanh %35 : vector<16x128xf32>
    %cst_17 = arith.constant 5.000000e-01 : f32
    %37 = vector.broadcast %cst_17 : f32 to vector<16x128xf32>
    %38 = arith.mulf %37, %36 : vector<16x128xf32>
    %cst_18 = arith.constant 5.000000e-01 : f32
    %39 = vector.broadcast %cst_18 : f32 to vector<16x128xf32>
    %40 = arith.addf %38, %39 : vector<16x128xf32>
    %41 = vector.extract_strided_slice %32 {offsets = [0, 128], sizes = [16, 128], strides = [1, 1]} : vector<16x512xf32> to vector<16x128xf32>
    %cst_19 = arith.constant 5.000000e-01 : f32
    %42 = vector.broadcast %cst_19 : f32 to vector<16x128xf32>
    %43 = arith.mulf %42, %41 : vector<16x128xf32>
    %44 = math.tanh %43 : vector<16x128xf32>
    %cst_20 = arith.constant 5.000000e-01 : f32
    %45 = vector.broadcast %cst_20 : f32 to vector<16x128xf32>
    %46 = arith.mulf %45, %44 : vector<16x128xf32>
    %cst_21 = arith.constant 5.000000e-01 : f32
    %47 = vector.broadcast %cst_21 : f32 to vector<16x128xf32>
    %48 = arith.addf %46, %47 : vector<16x128xf32>
    %49 = vector.extract_strided_slice %32 {offsets = [0, 256], sizes = [16, 128], strides = [1, 1]} : vector<16x512xf32> to vector<16x128xf32>
    %50 = math.tanh %49 : vector<16x128xf32>
    %51 = vector.extract_strided_slice %32 {offsets = [0, 384], sizes = [16, 128], strides = [1, 1]} : vector<16x512xf32> to vector<16x128xf32>
    %cst_22 = arith.constant 5.000000e-01 : f32
    %52 = vector.broadcast %cst_22 : f32 to vector<16x128xf32>
    %53 = arith.mulf %52, %51 : vector<16x128xf32>
    %54 = math.tanh %53 : vector<16x128xf32>
    %cst_23 = arith.constant 5.000000e-01 : f32
    %55 = vector.broadcast %cst_23 : f32 to vector<16x128xf32>
    %56 = arith.mulf %55, %54 : vector<16x128xf32>
    %cst_24 = arith.constant 5.000000e-01 : f32
    %57 = vector.broadcast %cst_24 : f32 to vector<16x128xf32>
    %58 = arith.addf %56, %57 : vector<16x128xf32>
    %59 = arith.mulf %48, %16 : vector<16x128xf32>
    %60 = arith.mulf %40, %50 : vector<16x128xf32>
    %61 = arith.addf %59, %60 : vector<16x128xf32>
    %62 = math.tanh %61 : vector<16x128xf32>
    %63 = arith.mulf %58, %62 : vector<16x128xf32>
    %c1_i32 = arith.constant 1 : i32
    %c8_i32_25 = arith.constant 8 : i32
    %64 = arith.muli %c1_i32, %c8_i32_25 : i32
    %65 = tpu.assume_multiple %64, 8 : i32
    %c7_i32_26 = arith.constant 7 : i32
    %66 = arith.subi %c7_i32_26, %c1_i32 : i32
    %c8_i32_27 = arith.constant 8 : i32
    %67 = arith.muli %66, %c8_i32_27 : i32
    %68 = tpu.assume_multiple %67, 8 : i32
    %69 = arith.index_cast %65 : i32 to index
    %c0_28 = arith.constant 0 : index
    %70 = vector.load %arg6[%69, %c0_28] : memref<64x1024xf32, #tpu.memory_space<vmem>>, vector<8x512xf32>
    %71 = arith.index_cast %68 : i32 to index
    %c512_29 = arith.constant 512 : index
    %72 = vector.load %arg6[%71, %c512_29] : memref<64x1024xf32, #tpu.memory_space<vmem>>, vector<8x512xf32>
    %73 = tpu.concatenate %70, %72 in 0 : vector<8x512xf32>, vector<8x512xf32> -> vector<16x512xf32>
    %74 = arith.mulf %63, %12 : vector<16x128xf32>
    %75 = arith.mulf %63, %14 : vector<16x128xf32>
    %76 = tpu.concatenate %74, %75 in 1 : vector<16x128xf32>, vector<16x128xf32> -> vector<16x256xf32>
    %77 = arith.truncf %76 : vector<16x256xf32> to vector<16x256xbf16>
    %cst_30 = arith.constant dense<0.000000e+00> : vector<16x512xf32>
    %78 = tpu.matmul %77, %7, %cst_30 {dimension_numbers = #tpu.dot_dimension_numbers<[1], [0], [0], [1], [0, 0, 1, 1], [], []>} : vector<16x256xbf16>, vector<256x512xbf16>, vector<16x512xf32> -> vector<16x512xf32>
    %79 = arith.addf %73, %78 : vector<16x512xf32>
    %80 = vector.extract_strided_slice %79 {offsets = [0, 0], sizes = [16, 128], strides = [1, 1]} : vector<16x512xf32> to vector<16x128xf32>
    %cst_31 = arith.constant 5.000000e-01 : f32
    %81 = vector.broadcast %cst_31 : f32 to vector<16x128xf32>
    %82 = arith.mulf %81, %80 : vector<16x128xf32>
    %83 = math.tanh %82 : vector<16x128xf32>
    %cst_32 = arith.constant 5.000000e-01 : f32
    %84 = vector.broadcast %cst_32 : f32 to vector<16x128xf32>
    %85 = arith.mulf %84, %83 : vector<16x128xf32>
    %cst_33 = arith.constant 5.000000e-01 : f32
    %86 = vector.broadcast %cst_33 : f32 to vector<16x128xf32>
    %87 = arith.addf %85, %86 : vector<16x128xf32>
    %88 = vector.extract_strided_slice %79 {offsets = [0, 128], sizes = [16, 128], strides = [1, 1]} : vector<16x512xf32> to vector<16x128xf32>
    %cst_34 = arith.constant 5.000000e-01 : f32
    %89 = vector.broadcast %cst_34 : f32 to vector<16x128xf32>
    %90 = arith.mulf %89, %88 : vector<16x128xf32>
    %91 = math.tanh %90 : vector<16x128xf32>
    %cst_35 = arith.constant 5.000000e-01 : f32
    %92 = vector.broadcast %cst_35 : f32 to vector<16x128xf32>
    %93 = arith.mulf %92, %91 : vector<16x128xf32>
    %cst_36 = arith.constant 5.000000e-01 : f32
    %94 = vector.broadcast %cst_36 : f32 to vector<16x128xf32>
    %95 = arith.addf %93, %94 : vector<16x128xf32>
    %96 = vector.extract_strided_slice %79 {offsets = [0, 256], sizes = [16, 128], strides = [1, 1]} : vector<16x512xf32> to vector<16x128xf32>
    %97 = math.tanh %96 : vector<16x128xf32>
    %98 = vector.extract_strided_slice %79 {offsets = [0, 384], sizes = [16, 128], strides = [1, 1]} : vector<16x512xf32> to vector<16x128xf32>
    %cst_37 = arith.constant 5.000000e-01 : f32
    %99 = vector.broadcast %cst_37 : f32 to vector<16x128xf32>
    %100 = arith.mulf %99, %98 : vector<16x128xf32>
    %101 = math.tanh %100 : vector<16x128xf32>
    %cst_38 = arith.constant 5.000000e-01 : f32
    %102 = vector.broadcast %cst_38 : f32 to vector<16x128xf32>
    %103 = arith.mulf %102, %101 : vector<16x128xf32>
    %cst_39 = arith.constant 5.000000e-01 : f32
    %104 = vector.broadcast %cst_39 : f32 to vector<16x128xf32>
    %105 = arith.addf %103, %104 : vector<16x128xf32>
    %106 = arith.mulf %95, %61 : vector<16x128xf32>
    %107 = arith.mulf %87, %97 : vector<16x128xf32>
    %108 = arith.addf %106, %107 : vector<16x128xf32>
    %109 = math.tanh %108 : vector<16x128xf32>
    %110 = arith.mulf %105, %109 : vector<16x128xf32>
    %c2_i32 = arith.constant 2 : i32
    %c8_i32_40 = arith.constant 8 : i32
    %111 = arith.muli %c2_i32, %c8_i32_40 : i32
    %112 = tpu.assume_multiple %111, 8 : i32
    %c7_i32_41 = arith.constant 7 : i32
    %113 = arith.subi %c7_i32_41, %c2_i32 : i32
    %c8_i32_42 = arith.constant 8 : i32
    %114 = arith.muli %113, %c8_i32_42 : i32
    %115 = tpu.assume_multiple %114, 8 : i32
    %116 = arith.index_cast %112 : i32 to index
    %c0_43 = arith.constant 0 : index
    %117 = vector.load %arg6[%116, %c0_43] : memref<64x1024xf32, #tpu.memory_space<vmem>>, vector<8x512xf32>
    %118 = arith.index_cast %115 : i32 to index
    %c512_44 = arith.constant 512 : index
    %119 = vector.load %arg6[%118, %c512_44] : memref<64x1024xf32, #tpu.memory_space<vmem>>, vector<8x512xf32>
    %120 = tpu.concatenate %117, %119 in 0 : vector<8x512xf32>, vector<8x512xf32> -> vector<16x512xf32>
    %121 = arith.mulf %110, %12 : vector<16x128xf32>
    %122 = arith.mulf %110, %14 : vector<16x128xf32>
    %123 = tpu.concatenate %121, %122 in 1 : vector<16x128xf32>, vector<16x128xf32> -> vector<16x256xf32>
    %124 = arith.truncf %123 : vector<16x256xf32> to vector<16x256xbf16>
    %cst_45 = arith.constant dense<0.000000e+00> : vector<16x512xf32>
    %125 = tpu.matmul %124, %7, %cst_45 {dimension_numbers = #tpu.dot_dimension_numbers<[1], [0], [0], [1], [0, 0, 1, 1], [], []>} : vector<16x256xbf16>, vector<256x512xbf16>, vector<16x512xf32> -> vector<16x512xf32>
    %126 = arith.addf %120, %125 : vector<16x512xf32>
    %127 = vector.extract_strided_slice %126 {offsets = [0, 0], sizes = [16, 128], strides = [1, 1]} : vector<16x512xf32> to vector<16x128xf32>
    %cst_46 = arith.constant 5.000000e-01 : f32
    %128 = vector.broadcast %cst_46 : f32 to vector<16x128xf32>
    %129 = arith.mulf %128, %127 : vector<16x128xf32>
    %130 = math.tanh %129 : vector<16x128xf32>
    %cst_47 = arith.constant 5.000000e-01 : f32
    %131 = vector.broadcast %cst_47 : f32 to vector<16x128xf32>
    %132 = arith.mulf %131, %130 : vector<16x128xf32>
    %cst_48 = arith.constant 5.000000e-01 : f32
    %133 = vector.broadcast %cst_48 : f32 to vector<16x128xf32>
    %134 = arith.addf %132, %133 : vector<16x128xf32>
    %135 = vector.extract_strided_slice %126 {offsets = [0, 128], sizes = [16, 128], strides = [1, 1]} : vector<16x512xf32> to vector<16x128xf32>
    %cst_49 = arith.constant 5.000000e-01 : f32
    %136 = vector.broadcast %cst_49 : f32 to vector<16x128xf32>
    %137 = arith.mulf %136, %135 : vector<16x128xf32>
    %138 = math.tanh %137 : vector<16x128xf32>
    %cst_50 = arith.constant 5.000000e-01 : f32
    %139 = vector.broadcast %cst_50 : f32 to vector<16x128xf32>
    %140 = arith.mulf %139, %138 : vector<16x128xf32>
    %cst_51 = arith.constant 5.000000e-01 : f32
    %141 = vector.broadcast %cst_51 : f32 to vector<16x128xf32>
    %142 = arith.addf %140, %141 : vector<16x128xf32>
    %143 = vector.extract_strided_slice %126 {offsets = [0, 256], sizes = [16, 128], strides = [1, 1]} : vector<16x512xf32> to vector<16x128xf32>
    %144 = math.tanh %143 : vector<16x128xf32>
    %145 = vector.extract_strided_slice %126 {offsets = [0, 384], sizes = [16, 128], strides = [1, 1]} : vector<16x512xf32> to vector<16x128xf32>
    %cst_52 = arith.constant 5.000000e-01 : f32
    %146 = vector.broadcast %cst_52 : f32 to vector<16x128xf32>
    %147 = arith.mulf %146, %145 : vector<16x128xf32>
    %148 = math.tanh %147 : vector<16x128xf32>
    %cst_53 = arith.constant 5.000000e-01 : f32
    %149 = vector.broadcast %cst_53 : f32 to vector<16x128xf32>
    %150 = arith.mulf %149, %148 : vector<16x128xf32>
    %cst_54 = arith.constant 5.000000e-01 : f32
    %151 = vector.broadcast %cst_54 : f32 to vector<16x128xf32>
    %152 = arith.addf %150, %151 : vector<16x128xf32>
    %153 = arith.mulf %142, %108 : vector<16x128xf32>
    %154 = arith.mulf %134, %144 : vector<16x128xf32>
    %155 = arith.addf %153, %154 : vector<16x128xf32>
    %156 = math.tanh %155 : vector<16x128xf32>
    %157 = arith.mulf %152, %156 : vector<16x128xf32>
    %c3_i32 = arith.constant 3 : i32
    %c8_i32_55 = arith.constant 8 : i32
    %158 = arith.muli %c3_i32, %c8_i32_55 : i32
    %159 = tpu.assume_multiple %158, 8 : i32
    %c7_i32_56 = arith.constant 7 : i32
    %160 = arith.subi %c7_i32_56, %c3_i32 : i32
    %c8_i32_57 = arith.constant 8 : i32
    %161 = arith.muli %160, %c8_i32_57 : i32
    %162 = tpu.assume_multiple %161, 8 : i32
    %163 = arith.index_cast %159 : i32 to index
    %c0_58 = arith.constant 0 : index
    %164 = vector.load %arg6[%163, %c0_58] : memref<64x1024xf32, #tpu.memory_space<vmem>>, vector<8x512xf32>
    %165 = arith.index_cast %162 : i32 to index
    %c512_59 = arith.constant 512 : index
    %166 = vector.load %arg6[%165, %c512_59] : memref<64x1024xf32, #tpu.memory_space<vmem>>, vector<8x512xf32>
    %167 = tpu.concatenate %164, %166 in 0 : vector<8x512xf32>, vector<8x512xf32> -> vector<16x512xf32>
    %168 = arith.mulf %157, %12 : vector<16x128xf32>
    %169 = arith.mulf %157, %14 : vector<16x128xf32>
    %170 = tpu.concatenate %168, %169 in 1 : vector<16x128xf32>, vector<16x128xf32> -> vector<16x256xf32>
    %171 = arith.truncf %170 : vector<16x256xf32> to vector<16x256xbf16>
    %cst_60 = arith.constant dense<0.000000e+00> : vector<16x512xf32>
    %172 = tpu.matmul %171, %7, %cst_60 {dimension_numbers = #tpu.dot_dimension_numbers<[1], [0], [0], [1], [0, 0, 1, 1], [], []>} : vector<16x256xbf16>, vector<256x512xbf16>, vector<16x512xf32> -> vector<16x512xf32>
    %173 = arith.addf %167, %172 : vector<16x512xf32>
    %174 = vector.extract_strided_slice %173 {offsets = [0, 0], sizes = [16, 128], strides = [1, 1]} : vector<16x512xf32> to vector<16x128xf32>
    %cst_61 = arith.constant 5.000000e-01 : f32
    %175 = vector.broadcast %cst_61 : f32 to vector<16x128xf32>
    %176 = arith.mulf %175, %174 : vector<16x128xf32>
    %177 = math.tanh %176 : vector<16x128xf32>
    %cst_62 = arith.constant 5.000000e-01 : f32
    %178 = vector.broadcast %cst_62 : f32 to vector<16x128xf32>
    %179 = arith.mulf %178, %177 : vector<16x128xf32>
    %cst_63 = arith.constant 5.000000e-01 : f32
    %180 = vector.broadcast %cst_63 : f32 to vector<16x128xf32>
    %181 = arith.addf %179, %180 : vector<16x128xf32>
    %182 = vector.extract_strided_slice %173 {offsets = [0, 128], sizes = [16, 128], strides = [1, 1]} : vector<16x512xf32> to vector<16x128xf32>
    %cst_64 = arith.constant 5.000000e-01 : f32
    %183 = vector.broadcast %cst_64 : f32 to vector<16x128xf32>
    %184 = arith.mulf %183, %182 : vector<16x128xf32>
    %185 = math.tanh %184 : vector<16x128xf32>
    %cst_65 = arith.constant 5.000000e-01 : f32
    %186 = vector.broadcast %cst_65 : f32 to vector<16x128xf32>
    %187 = arith.mulf %186, %185 : vector<16x128xf32>
    %cst_66 = arith.constant 5.000000e-01 : f32
    %188 = vector.broadcast %cst_66 : f32 to vector<16x128xf32>
    %189 = arith.addf %187, %188 : vector<16x128xf32>
    %190 = vector.extract_strided_slice %173 {offsets = [0, 256], sizes = [16, 128], strides = [1, 1]} : vector<16x512xf32> to vector<16x128xf32>
    %191 = math.tanh %190 : vector<16x128xf32>
    %192 = vector.extract_strided_slice %173 {offsets = [0, 384], sizes = [16, 128], strides = [1, 1]} : vector<16x512xf32> to vector<16x128xf32>
    %cst_67 = arith.constant 5.000000e-01 : f32
    %193 = vector.broadcast %cst_67 : f32 to vector<16x128xf32>
    %194 = arith.mulf %193, %192 : vector<16x128xf32>
    %195 = math.tanh %194 : vector<16x128xf32>
    %cst_68 = arith.constant 5.000000e-01 : f32
    %196 = vector.broadcast %cst_68 : f32 to vector<16x128xf32>
    %197 = arith.mulf %196, %195 : vector<16x128xf32>
    %cst_69 = arith.constant 5.000000e-01 : f32
    %198 = vector.broadcast %cst_69 : f32 to vector<16x128xf32>
    %199 = arith.addf %197, %198 : vector<16x128xf32>
    %200 = arith.mulf %189, %155 : vector<16x128xf32>
    %201 = arith.mulf %181, %191 : vector<16x128xf32>
    %202 = arith.addf %200, %201 : vector<16x128xf32>
    %203 = math.tanh %202 : vector<16x128xf32>
    %204 = arith.mulf %199, %203 : vector<16x128xf32>
    %c4_i32 = arith.constant 4 : i32
    %c8_i32_70 = arith.constant 8 : i32
    %205 = arith.muli %c4_i32, %c8_i32_70 : i32
    %206 = tpu.assume_multiple %205, 8 : i32
    %c7_i32_71 = arith.constant 7 : i32
    %207 = arith.subi %c7_i32_71, %c4_i32 : i32
    %c8_i32_72 = arith.constant 8 : i32
    %208 = arith.muli %207, %c8_i32_72 : i32
    %209 = tpu.assume_multiple %208, 8 : i32
    %210 = arith.index_cast %206 : i32 to index
    %c0_73 = arith.constant 0 : index
    %211 = vector.load %arg6[%210, %c0_73] : memref<64x1024xf32, #tpu.memory_space<vmem>>, vector<8x512xf32>
    %212 = arith.index_cast %209 : i32 to index
    %c512_74 = arith.constant 512 : index
    %213 = vector.load %arg6[%212, %c512_74] : memref<64x1024xf32, #tpu.memory_space<vmem>>, vector<8x512xf32>
    %214 = tpu.concatenate %211, %213 in 0 : vector<8x512xf32>, vector<8x512xf32> -> vector<16x512xf32>
    %215 = arith.mulf %204, %12 : vector<16x128xf32>
    %216 = arith.mulf %204, %14 : vector<16x128xf32>
    %217 = tpu.concatenate %215, %216 in 1 : vector<16x128xf32>, vector<16x128xf32> -> vector<16x256xf32>
    %218 = arith.truncf %217 : vector<16x256xf32> to vector<16x256xbf16>
    %cst_75 = arith.constant dense<0.000000e+00> : vector<16x512xf32>
    %219 = tpu.matmul %218, %7, %cst_75 {dimension_numbers = #tpu.dot_dimension_numbers<[1], [0], [0], [1], [0, 0, 1, 1], [], []>} : vector<16x256xbf16>, vector<256x512xbf16>, vector<16x512xf32> -> vector<16x512xf32>
    %220 = arith.addf %214, %219 : vector<16x512xf32>
    %221 = vector.extract_strided_slice %220 {offsets = [0, 0], sizes = [16, 128], strides = [1, 1]} : vector<16x512xf32> to vector<16x128xf32>
    %cst_76 = arith.constant 5.000000e-01 : f32
    %222 = vector.broadcast %cst_76 : f32 to vector<16x128xf32>
    %223 = arith.mulf %222, %221 : vector<16x128xf32>
    %224 = math.tanh %223 : vector<16x128xf32>
    %cst_77 = arith.constant 5.000000e-01 : f32
    %225 = vector.broadcast %cst_77 : f32 to vector<16x128xf32>
    %226 = arith.mulf %225, %224 : vector<16x128xf32>
    %cst_78 = arith.constant 5.000000e-01 : f32
    %227 = vector.broadcast %cst_78 : f32 to vector<16x128xf32>
    %228 = arith.addf %226, %227 : vector<16x128xf32>
    %229 = vector.extract_strided_slice %220 {offsets = [0, 128], sizes = [16, 128], strides = [1, 1]} : vector<16x512xf32> to vector<16x128xf32>
    %cst_79 = arith.constant 5.000000e-01 : f32
    %230 = vector.broadcast %cst_79 : f32 to vector<16x128xf32>
    %231 = arith.mulf %230, %229 : vector<16x128xf32>
    %232 = math.tanh %231 : vector<16x128xf32>
    %cst_80 = arith.constant 5.000000e-01 : f32
    %233 = vector.broadcast %cst_80 : f32 to vector<16x128xf32>
    %234 = arith.mulf %233, %232 : vector<16x128xf32>
    %cst_81 = arith.constant 5.000000e-01 : f32
    %235 = vector.broadcast %cst_81 : f32 to vector<16x128xf32>
    %236 = arith.addf %234, %235 : vector<16x128xf32>
    %237 = vector.extract_strided_slice %220 {offsets = [0, 256], sizes = [16, 128], strides = [1, 1]} : vector<16x512xf32> to vector<16x128xf32>
    %238 = math.tanh %237 : vector<16x128xf32>
    %239 = vector.extract_strided_slice %220 {offsets = [0, 384], sizes = [16, 128], strides = [1, 1]} : vector<16x512xf32> to vector<16x128xf32>
    %cst_82 = arith.constant 5.000000e-01 : f32
    %240 = vector.broadcast %cst_82 : f32 to vector<16x128xf32>
    %241 = arith.mulf %240, %239 : vector<16x128xf32>
    %242 = math.tanh %241 : vector<16x128xf32>
    %cst_83 = arith.constant 5.000000e-01 : f32
    %243 = vector.broadcast %cst_83 : f32 to vector<16x128xf32>
    %244 = arith.mulf %243, %242 : vector<16x128xf32>
    %cst_84 = arith.constant 5.000000e-01 : f32
    %245 = vector.broadcast %cst_84 : f32 to vector<16x128xf32>
    %246 = arith.addf %244, %245 : vector<16x128xf32>
    %247 = arith.mulf %236, %202 : vector<16x128xf32>
    %248 = arith.mulf %228, %238 : vector<16x128xf32>
    %249 = arith.addf %247, %248 : vector<16x128xf32>
    %250 = math.tanh %249 : vector<16x128xf32>
    %251 = arith.mulf %246, %250 : vector<16x128xf32>
    %c5_i32 = arith.constant 5 : i32
    %c8_i32_85 = arith.constant 8 : i32
    %252 = arith.muli %c5_i32, %c8_i32_85 : i32
    %253 = tpu.assume_multiple %252, 8 : i32
    %c7_i32_86 = arith.constant 7 : i32
    %254 = arith.subi %c7_i32_86, %c5_i32 : i32
    %c8_i32_87 = arith.constant 8 : i32
    %255 = arith.muli %254, %c8_i32_87 : i32
    %256 = tpu.assume_multiple %255, 8 : i32
    %257 = arith.index_cast %253 : i32 to index
    %c0_88 = arith.constant 0 : index
    %258 = vector.load %arg6[%257, %c0_88] : memref<64x1024xf32, #tpu.memory_space<vmem>>, vector<8x512xf32>
    %259 = arith.index_cast %256 : i32 to index
    %c512_89 = arith.constant 512 : index
    %260 = vector.load %arg6[%259, %c512_89] : memref<64x1024xf32, #tpu.memory_space<vmem>>, vector<8x512xf32>
    %261 = tpu.concatenate %258, %260 in 0 : vector<8x512xf32>, vector<8x512xf32> -> vector<16x512xf32>
    %262 = arith.mulf %251, %12 : vector<16x128xf32>
    %263 = arith.mulf %251, %14 : vector<16x128xf32>
    %264 = tpu.concatenate %262, %263 in 1 : vector<16x128xf32>, vector<16x128xf32> -> vector<16x256xf32>
    %265 = arith.truncf %264 : vector<16x256xf32> to vector<16x256xbf16>
    %cst_90 = arith.constant dense<0.000000e+00> : vector<16x512xf32>
    %266 = tpu.matmul %265, %7, %cst_90 {dimension_numbers = #tpu.dot_dimension_numbers<[1], [0], [0], [1], [0, 0, 1, 1], [], []>} : vector<16x256xbf16>, vector<256x512xbf16>, vector<16x512xf32> -> vector<16x512xf32>
    %267 = arith.addf %261, %266 : vector<16x512xf32>
    %268 = vector.extract_strided_slice %267 {offsets = [0, 0], sizes = [16, 128], strides = [1, 1]} : vector<16x512xf32> to vector<16x128xf32>
    %cst_91 = arith.constant 5.000000e-01 : f32
    %269 = vector.broadcast %cst_91 : f32 to vector<16x128xf32>
    %270 = arith.mulf %269, %268 : vector<16x128xf32>
    %271 = math.tanh %270 : vector<16x128xf32>
    %cst_92 = arith.constant 5.000000e-01 : f32
    %272 = vector.broadcast %cst_92 : f32 to vector<16x128xf32>
    %273 = arith.mulf %272, %271 : vector<16x128xf32>
    %cst_93 = arith.constant 5.000000e-01 : f32
    %274 = vector.broadcast %cst_93 : f32 to vector<16x128xf32>
    %275 = arith.addf %273, %274 : vector<16x128xf32>
    %276 = vector.extract_strided_slice %267 {offsets = [0, 128], sizes = [16, 128], strides = [1, 1]} : vector<16x512xf32> to vector<16x128xf32>
    %cst_94 = arith.constant 5.000000e-01 : f32
    %277 = vector.broadcast %cst_94 : f32 to vector<16x128xf32>
    %278 = arith.mulf %277, %276 : vector<16x128xf32>
    %279 = math.tanh %278 : vector<16x128xf32>
    %cst_95 = arith.constant 5.000000e-01 : f32
    %280 = vector.broadcast %cst_95 : f32 to vector<16x128xf32>
    %281 = arith.mulf %280, %279 : vector<16x128xf32>
    %cst_96 = arith.constant 5.000000e-01 : f32
    %282 = vector.broadcast %cst_96 : f32 to vector<16x128xf32>
    %283 = arith.addf %281, %282 : vector<16x128xf32>
    %284 = vector.extract_strided_slice %267 {offsets = [0, 256], sizes = [16, 128], strides = [1, 1]} : vector<16x512xf32> to vector<16x128xf32>
    %285 = math.tanh %284 : vector<16x128xf32>
    %286 = vector.extract_strided_slice %267 {offsets = [0, 384], sizes = [16, 128], strides = [1, 1]} : vector<16x512xf32> to vector<16x128xf32>
    %cst_97 = arith.constant 5.000000e-01 : f32
    %287 = vector.broadcast %cst_97 : f32 to vector<16x128xf32>
    %288 = arith.mulf %287, %286 : vector<16x128xf32>
    %289 = math.tanh %288 : vector<16x128xf32>
    %cst_98 = arith.constant 5.000000e-01 : f32
    %290 = vector.broadcast %cst_98 : f32 to vector<16x128xf32>
    %291 = arith.mulf %290, %289 : vector<16x128xf32>
    %cst_99 = arith.constant 5.000000e-01 : f32
    %292 = vector.broadcast %cst_99 : f32 to vector<16x128xf32>
    %293 = arith.addf %291, %292 : vector<16x128xf32>
    %294 = arith.mulf %283, %249 : vector<16x128xf32>
    %295 = arith.mulf %275, %285 : vector<16x128xf32>
    %296 = arith.addf %294, %295 : vector<16x128xf32>
    %297 = math.tanh %296 : vector<16x128xf32>
    %298 = arith.mulf %293, %297 : vector<16x128xf32>
    %c6_i32 = arith.constant 6 : i32
    %c8_i32_100 = arith.constant 8 : i32
    %299 = arith.muli %c6_i32, %c8_i32_100 : i32
    %300 = tpu.assume_multiple %299, 8 : i32
    %c7_i32_101 = arith.constant 7 : i32
    %301 = arith.subi %c7_i32_101, %c6_i32 : i32
    %c8_i32_102 = arith.constant 8 : i32
    %302 = arith.muli %301, %c8_i32_102 : i32
    %303 = tpu.assume_multiple %302, 8 : i32
    %304 = arith.index_cast %300 : i32 to index
    %c0_103 = arith.constant 0 : index
    %305 = vector.load %arg6[%304, %c0_103] : memref<64x1024xf32, #tpu.memory_space<vmem>>, vector<8x512xf32>
    %306 = arith.index_cast %303 : i32 to index
    %c512_104 = arith.constant 512 : index
    %307 = vector.load %arg6[%306, %c512_104] : memref<64x1024xf32, #tpu.memory_space<vmem>>, vector<8x512xf32>
    %308 = tpu.concatenate %305, %307 in 0 : vector<8x512xf32>, vector<8x512xf32> -> vector<16x512xf32>
    %309 = arith.mulf %298, %12 : vector<16x128xf32>
    %310 = arith.mulf %298, %14 : vector<16x128xf32>
    %311 = tpu.concatenate %309, %310 in 1 : vector<16x128xf32>, vector<16x128xf32> -> vector<16x256xf32>
    %312 = arith.truncf %311 : vector<16x256xf32> to vector<16x256xbf16>
    %cst_105 = arith.constant dense<0.000000e+00> : vector<16x512xf32>
    %313 = tpu.matmul %312, %7, %cst_105 {dimension_numbers = #tpu.dot_dimension_numbers<[1], [0], [0], [1], [0, 0, 1, 1], [], []>} : vector<16x256xbf16>, vector<256x512xbf16>, vector<16x512xf32> -> vector<16x512xf32>
    %314 = arith.addf %308, %313 : vector<16x512xf32>
    %315 = vector.extract_strided_slice %314 {offsets = [0, 0], sizes = [16, 128], strides = [1, 1]} : vector<16x512xf32> to vector<16x128xf32>
    %cst_106 = arith.constant 5.000000e-01 : f32
    %316 = vector.broadcast %cst_106 : f32 to vector<16x128xf32>
    %317 = arith.mulf %316, %315 : vector<16x128xf32>
    %318 = math.tanh %317 : vector<16x128xf32>
    %cst_107 = arith.constant 5.000000e-01 : f32
    %319 = vector.broadcast %cst_107 : f32 to vector<16x128xf32>
    %320 = arith.mulf %319, %318 : vector<16x128xf32>
    %cst_108 = arith.constant 5.000000e-01 : f32
    %321 = vector.broadcast %cst_108 : f32 to vector<16x128xf32>
    %322 = arith.addf %320, %321 : vector<16x128xf32>
    %323 = vector.extract_strided_slice %314 {offsets = [0, 128], sizes = [16, 128], strides = [1, 1]} : vector<16x512xf32> to vector<16x128xf32>
    %cst_109 = arith.constant 5.000000e-01 : f32
    %324 = vector.broadcast %cst_109 : f32 to vector<16x128xf32>
    %325 = arith.mulf %324, %323 : vector<16x128xf32>
    %326 = math.tanh %325 : vector<16x128xf32>
    %cst_110 = arith.constant 5.000000e-01 : f32
    %327 = vector.broadcast %cst_110 : f32 to vector<16x128xf32>
    %328 = arith.mulf %327, %326 : vector<16x128xf32>
    %cst_111 = arith.constant 5.000000e-01 : f32
    %329 = vector.broadcast %cst_111 : f32 to vector<16x128xf32>
    %330 = arith.addf %328, %329 : vector<16x128xf32>
    %331 = vector.extract_strided_slice %314 {offsets = [0, 256], sizes = [16, 128], strides = [1, 1]} : vector<16x512xf32> to vector<16x128xf32>
    %332 = math.tanh %331 : vector<16x128xf32>
    %333 = vector.extract_strided_slice %314 {offsets = [0, 384], sizes = [16, 128], strides = [1, 1]} : vector<16x512xf32> to vector<16x128xf32>
    %cst_112 = arith.constant 5.000000e-01 : f32
    %334 = vector.broadcast %cst_112 : f32 to vector<16x128xf32>
    %335 = arith.mulf %334, %333 : vector<16x128xf32>
    %336 = math.tanh %335 : vector<16x128xf32>
    %cst_113 = arith.constant 5.000000e-01 : f32
    %337 = vector.broadcast %cst_113 : f32 to vector<16x128xf32>
    %338 = arith.mulf %337, %336 : vector<16x128xf32>
    %cst_114 = arith.constant 5.000000e-01 : f32
    %339 = vector.broadcast %cst_114 : f32 to vector<16x128xf32>
    %340 = arith.addf %338, %339 : vector<16x128xf32>
    %341 = arith.mulf %330, %296 : vector<16x128xf32>
    %342 = arith.mulf %322, %332 : vector<16x128xf32>
    %343 = arith.addf %341, %342 : vector<16x128xf32>
    %344 = math.tanh %343 : vector<16x128xf32>
    %345 = arith.mulf %340, %344 : vector<16x128xf32>
    %c7_i32_115 = arith.constant 7 : i32
    %c8_i32_116 = arith.constant 8 : i32
    %346 = arith.muli %c7_i32_115, %c8_i32_116 : i32
    %347 = tpu.assume_multiple %346, 8 : i32
    %c7_i32_117 = arith.constant 7 : i32
    %348 = arith.subi %c7_i32_117, %c7_i32_115 : i32
    %c8_i32_118 = arith.constant 8 : i32
    %349 = arith.muli %348, %c8_i32_118 : i32
    %350 = tpu.assume_multiple %349, 8 : i32
    %351 = arith.index_cast %347 : i32 to index
    %c0_119 = arith.constant 0 : index
    %352 = vector.load %arg6[%351, %c0_119] : memref<64x1024xf32, #tpu.memory_space<vmem>>, vector<8x512xf32>
    %353 = arith.index_cast %350 : i32 to index
    %c512_120 = arith.constant 512 : index
    %354 = vector.load %arg6[%353, %c512_120] : memref<64x1024xf32, #tpu.memory_space<vmem>>, vector<8x512xf32>
    %355 = tpu.concatenate %352, %354 in 0 : vector<8x512xf32>, vector<8x512xf32> -> vector<16x512xf32>
    %356 = arith.mulf %345, %12 : vector<16x128xf32>
    %357 = arith.mulf %345, %14 : vector<16x128xf32>
    %358 = tpu.concatenate %356, %357 in 1 : vector<16x128xf32>, vector<16x128xf32> -> vector<16x256xf32>
    %359 = arith.truncf %358 : vector<16x256xf32> to vector<16x256xbf16>
    %cst_121 = arith.constant dense<0.000000e+00> : vector<16x512xf32>
    %360 = tpu.matmul %359, %7, %cst_121 {dimension_numbers = #tpu.dot_dimension_numbers<[1], [0], [0], [1], [0, 0, 1, 1], [], []>} : vector<16x256xbf16>, vector<256x512xbf16>, vector<16x512xf32> -> vector<16x512xf32>
    %361 = arith.addf %355, %360 : vector<16x512xf32>
    %362 = vector.extract_strided_slice %361 {offsets = [0, 0], sizes = [16, 128], strides = [1, 1]} : vector<16x512xf32> to vector<16x128xf32>
    %cst_122 = arith.constant 5.000000e-01 : f32
    %363 = vector.broadcast %cst_122 : f32 to vector<16x128xf32>
    %364 = arith.mulf %363, %362 : vector<16x128xf32>
    %365 = math.tanh %364 : vector<16x128xf32>
    %cst_123 = arith.constant 5.000000e-01 : f32
    %366 = vector.broadcast %cst_123 : f32 to vector<16x128xf32>
    %367 = arith.mulf %366, %365 : vector<16x128xf32>
    %cst_124 = arith.constant 5.000000e-01 : f32
    %368 = vector.broadcast %cst_124 : f32 to vector<16x128xf32>
    %369 = arith.addf %367, %368 : vector<16x128xf32>
    %370 = vector.extract_strided_slice %361 {offsets = [0, 128], sizes = [16, 128], strides = [1, 1]} : vector<16x512xf32> to vector<16x128xf32>
    %cst_125 = arith.constant 5.000000e-01 : f32
    %371 = vector.broadcast %cst_125 : f32 to vector<16x128xf32>
    %372 = arith.mulf %371, %370 : vector<16x128xf32>
    %373 = math.tanh %372 : vector<16x128xf32>
    %cst_126 = arith.constant 5.000000e-01 : f32
    %374 = vector.broadcast %cst_126 : f32 to vector<16x128xf32>
    %375 = arith.mulf %374, %373 : vector<16x128xf32>
    %cst_127 = arith.constant 5.000000e-01 : f32
    %376 = vector.broadcast %cst_127 : f32 to vector<16x128xf32>
    %377 = arith.addf %375, %376 : vector<16x128xf32>
    %378 = vector.extract_strided_slice %361 {offsets = [0, 256], sizes = [16, 128], strides = [1, 1]} : vector<16x512xf32> to vector<16x128xf32>
    %379 = math.tanh %378 : vector<16x128xf32>
    %380 = vector.extract_strided_slice %361 {offsets = [0, 384], sizes = [16, 128], strides = [1, 1]} : vector<16x512xf32> to vector<16x128xf32>
    %cst_128 = arith.constant 5.000000e-01 : f32
    %381 = vector.broadcast %cst_128 : f32 to vector<16x128xf32>
    %382 = arith.mulf %381, %380 : vector<16x128xf32>
    %383 = math.tanh %382 : vector<16x128xf32>
    %cst_129 = arith.constant 5.000000e-01 : f32
    %384 = vector.broadcast %cst_129 : f32 to vector<16x128xf32>
    %385 = arith.mulf %384, %383 : vector<16x128xf32>
    %cst_130 = arith.constant 5.000000e-01 : f32
    %386 = vector.broadcast %cst_130 : f32 to vector<16x128xf32>
    %387 = arith.addf %385, %386 : vector<16x128xf32>
    %388 = arith.mulf %377, %343 : vector<16x128xf32>
    %389 = arith.mulf %369, %379 : vector<16x128xf32>
    %390 = arith.addf %388, %389 : vector<16x128xf32>
    %391 = math.tanh %390 : vector<16x128xf32>
    %392 = arith.mulf %387, %391 : vector<16x128xf32>
    %c8_i32_131 = arith.constant 8 : i32
    %c0_132 = arith.constant 0 : index
    %c0_133 = arith.constant 0 : index
    %393 = vector.load %arg5[%c0_132, %c0_133] : memref<16x128xf32, #tpu.memory_space<vmem>>, vector<16x128xf32>
    tpu.vector_store %arg5[%c0_132, %c0_133], %392 {strides = array<i32>} : memref<16x128xf32, #tpu.memory_space<vmem>>, vector<16x128xf32>,
    return
  }
  func.func @transform_0(%arg0: i32) -> (i32, i32) {
    %c0_i32 = arith.constant 0 : i32
    %c0_i32_0 = arith.constant 0 : i32
    %c0_i32_1 = arith.constant 0 : i32
    return %c0_i32, %c0_i32_0 : i32, i32
  }
  func.func @transform_1(%arg0: i32) -> (i32, i32) {
    %c0_i32 = arith.constant 0 : i32
    %c0_i32_0 = arith.constant 0 : i32
    %c0_i32_1 = arith.constant 0 : i32
    return %c0_i32, %c0_i32_0 : i32, i32
  }
  func.func @transform_2(%arg0: i32) -> (i32, i32) {
    %c0_i32 = arith.constant 0 : i32
    %c0_i32_0 = arith.constant 0 : i32
    %c0_i32_1 = arith.constant 0 : i32
    return %c0_i32, %c0_i32_0 : i32, i32
  }
  func.func @transform_3(%arg0: i32) -> (i32, i32) {
    %c0_i32 = arith.constant 0 : i32
    %c0_i32_0 = arith.constant 0 : i32
    %c0_i32_1 = arith.constant 0 : i32
    return %c0_i32, %c0_i32_0 : i32, i32
  }
  func.func @transform_4(%arg0: i32) -> (i32, i32) {
    %c0_i32 = arith.constant 0 : i32
    %c0_i32_0 = arith.constant 0 : i32
    %c0_i32_1 = arith.constant 0 : i32
    return %c0_i32, %c0_i32_0 : i32, i32
  }
}

</mosaic_0001>

<llo_original>
// kernel: midi_encoder_forward.1
$region0: #{midi_encoder_forward.1}
  #allocation0 [shape = 'u32[]', space=smem, size = 0x4, offset = 0x4, fixed_abs, tag = 'smem constant byte address 0x4 - core index']
  #allocation1 [shape = 'u32[144,128]{1,0:T(1,128)}', space=vmem, size = 0x12000, scoped, tag = 'internal scratch']
  #allocation2 [shape = 'f32[64,1024]{1,0:T(8,128)}', space=vmem, size = 0x40000, scoped, tag = 'scratch operand']
  %s0 = inlined_call_operand.vmem [shape: bf16[64,128], index: 0, kind: input, shape index: {}]
  %s1 = inlined_call_operand.hbm [shape: bf16[128,1024], index: 1, kind: input, shape index: {}]
  %s2 = inlined_call_operand.hbm [shape: bf16[256,512], index: 2, kind: input, shape index: {}]
  %s3 = inlined_call_operand.vmem [shape: f32[1,1024], index: 3, kind: input, shape index: {}]
  %s4 = inlined_call_operand.vmem [shape: f32[16,128], index: 4, kind: output, shape index: {}]
  %s5 = sld [smem:[#allocation0]]
  $region34: #{midi_encoder_forward.1} parent=0
    _
  %s7 = ssub.s32 1, %s5
  %s8 = scalar_select 0, %s7, %s5
  $region1: #{midi_encoder_forward.1} parent=0
    #allocation3 [shape = 'u8[262144]{0}', space=vmem, size = 0x40000, scoped, tag = 'input window, operand 1, single buffered']
    #allocation4 [shape = 's32[1]{0}', space=sflag, size = 0x4, scoped, tag = 'scoped memory for midi_encoder_forward.1']
    #allocation5 [shape = 'u8[262144]{0}', space=vmem, size = 0x40000, scoped, tag = 'input window, operand 2, single buffered']
    #allocation6 [shape = 's32[1]{0}', space=sflag, size = 0x4, scoped, tag = 'scoped memory for midi_encoder_forward.1']
    %9 = vsyncpa [#allocation4], 0
    %10 = vsyncpa [#allocation6], 0
    // Predicated region
    $region2: #{midi_encoder_forward.1} parent=1 // pred_check
      _
    $region3: #{midi_encoder_forward.1} parent=1 // pred_check_branch
      %12 = sbr.rel (0) target = $region5
    $region4: #{midi_encoder_forward.1} parent=1 // pred_region
      _
    $region5: #{midi_encoder_forward.1} parent=1 // pred_fallthru
      _
    // Predicated region
    $region6: #{midi_encoder_forward.1} parent=1 // pred_check
      _
    $region7: #{midi_encoder_forward.1} parent=1 // pred_check_branch
      %14 = sbr.rel (0) target = $region9
    $region8: #{midi_encoder_forward.1} parent=1 // pred_region
      %s16 = ssub.s32 8192, 8192
      %17 = vsyncadd [#allocation4], %s16
      %s18 = sshll.u32 [#allocation3], 4
      %s19 = int_to_ptr.vmem [resolvable:$true] %s18
      %24 = dma.hbm_to_vmem [thread:$0]  %s1, 8192, %s19, [#allocation4], 512, 512, 32
    $region9: #{midi_encoder_forward.1} parent=1 // pred_fallthru
      _
    // Predicated region
    $region10: #{midi_encoder_forward.1} parent=1 // pred_check
      _
    $region11: #{midi_encoder_forward.1} parent=1 // pred_check_branch
      %26 = sbr.rel (0) target = $region13
    $region12: #{midi_encoder_forward.1} parent=1 // pred_region
      %s28 = ssub.s32 8192, 8192
      %29 = vsyncadd [#allocation6], %s28
      %s30 = sshll.u32 [#allocation5], 4
      %s31 = int_to_ptr.vmem [resolvable:$true] %s30
      %36 = dma.hbm_to_vmem [thread:$0]  %s2, 8192, %s31, [#allocation6], 256, 256, 16
    $region13: #{midi_encoder_forward.1} parent=1 // pred_fallthru
      _
    // Predicated region
    $region14: #{midi_encoder_forward.1} parent=1 // pred_check
      _
    $region15: #{midi_encoder_forward.1} parent=1 // pred_check_branch
      %38 = sbr.rel (0) target = $region17
    $region16: #{midi_encoder_forward.1} parent=1 // pred_region
      _
    $region17: #{midi_encoder_forward.1} parent=1 // pred_fallthru
      _
    // Predicated region
    $region18: #{midi_encoder_forward.1} parent=1 // pred_check
      _
    $region19: #{midi_encoder_forward.1} parent=1 // pred_check_branch
      %40 = sbr.rel (0) target = $region21
    $region20: #{midi_encoder_forward.1} parent=1 // pred_region
      %41 = dma.done [#allocation4], 8192
    $region21: #{midi_encoder_forward.1} parent=1 // pred_fallthru
      _
    // Predicated region
    $region22: #{midi_encoder_forward.1} parent=1 // pred_check
      _
    $region23: #{midi_encoder_forward.1} parent=1 // pred_check_branch
      %43 = sbr.rel (0) target = $region25
    $region24: #{midi_encoder_forward.1} parent=1 // pred_region
      %44 = dma.done [#allocation6], 8192
    $region25: #{midi_encoder_forward.1} parent=1 // pred_fallthru
      _
    %v46 = vld [vmem:[%s0] sm:$0xf]
    %v47 = vld [vmem:[%s0 + $0x4] sm:$0xf]
    %v48 = vld [vmem:[%s0 + $0x8] sm:$0xf]
    %v49 = vld [vmem:[%s0 + $0xc] sm:$0xf]
    %v50 = vld [vmem:[%s0 + $0x10] sm:$0xf]
    %v51 = vld [vmem:[%s0 + $0x14] sm:$0xf]
    %v52 = vld [vmem:[%s0 + $0x18] sm:$0xf]
    %v53 = vld [vmem:[%s0 + $0x1c] sm:$0xf]
    %v54 = vld [vmem:[#allocation3] sm:$0xff]
    %v55 = vld [vmem:[#allocation3 + $0x8] sm:$0xff]
    %v56 = vld [vmem:[#allocation3 + $0x10] sm:$0xff]
    %v57 = vld [vmem:[#allocation3 + $0x18] sm:$0xff]
    %v58 = vld [vmem:[#allocation3 + $0x20] sm:$0xff]
    %v59 = vld [vmem:[#allocation3 + $0x28] sm:$0xff]
    %v60 = vld [vmem:[#allocation3 + $0x30] sm:$0xff]
    %v61 = vld [vmem:[#allocation3 + $0x38] sm:$0xff]
    %v62 = vld [vmem:[#allocation3 + $0x40] sm:$0xff]
    %v63 = vld [vmem:[#allocation3 + $0x48] sm:$0xff]
    %v64 = vld [vmem:[#allocation3 + $0x50] sm:$0xff]
    %v65 = vld [vmem:[#allocation3 + $0x58] sm:$0xff]
    %v66 = vld [vmem:[#allocation3 + $0x60] sm:$0xff]
    %v67 = vld [vmem:[#allocation3 + $0x68] sm:$0xff]
    %v68 = vld [vmem:[#allocation3 + $0x70] sm:$0xff]
    %v69 = vld [vmem:[#allocation3 + $0x78] sm:$0xff]
    %v70 = vld [vmem:[#allocation3 + $0x80] sm:$0xff]
    %v71 = vld [vmem:[#allocation3 + $0x88] sm:$0xff]
    %v72 = vld [vmem:[#allocation3 + $0x90] sm:$0xff]
    %v73 = vld [vmem:[#allocation3 + $0x98] sm:$0xff]
    %v74 = vld [vmem:[#allocation3 + $0xa0] sm:$0xff]
    %v75 = vld [vmem:[#allocation3 + $0xa8] sm:$0xff]
    %v76 = vld [vmem:[#allocation3 + $0xb0] sm:$0xff]
    %v77 = vld [vmem:[#allocation3 + $0xb8] sm:$0xff]
    %v78 = vld [vmem:[#allocation3 + $0xc0] sm:$0xff]
    %v79 = vld [vmem:[#allocation3 + $0xc8] sm:$0xff]
    %v80 = vld [vmem:[#allocation3 + $0xd0] sm:$0xff]
    %v81 = vld [vmem:[#allocation3 + $0xd8] sm:$0xff]
    %v82 = vld [vmem:[#allocation3 + $0xe0] sm:$0xff]
    %v83 = vld [vmem:[#allocation3 + $0xe8] sm:$0xff]
    %v84 = vld [vmem:[#allocation3 + $0xf0] sm:$0xff]
    %v85 = vld [vmem:[#allocation3 + $0xf8] sm:$0xff]
    %v86 = vld [vmem:[#allocation3 + $0x100] sm:$0xff]
    %v87 = vld [vmem:[#allocation3 + $0x108] sm:$0xff]
    %v88 = vld [vmem:[#allocation3 + $0x110] sm:$0xff]
    %v89 = vld [vmem:[#allocation3 + $0x118] sm:$0xff]
    %v90 = vld [vmem:[#allocation3 + $0x120] sm:$0xff]
    %v91 = vld [vmem:[#allocation3 + $0x128] sm:$0xff]
    %v92 = vld [vmem:[#allocation3 + $0x130] sm:$0xff]
    %v93 = vld [vmem:[#allocation3 + $0x138] sm:$0xff]
    %v94 = vld [vmem:[#allocation3 + $0x140] sm:$0xff]
    %v95 = vld [vmem:[#allocation3 + $0x148] sm:$0xff]
    %v96 = vld [vmem:[#allocation3 + $0x150] sm:$0xff]
    %v97 = vld [vmem:[#allocation3 + $0x158] sm:$0xff]
    %v98 = vld [vmem:[#allocation3 + $0x160] sm:$0xff]
    %v99 = vld [vmem:[#allocation3 + $0x168] sm:$0xff]
    %v100 = vld [vmem:[#allocation3 + $0x170] sm:$0xff]
    %v101 = vld [vmem:[#allocation3 + $0x178] sm:$0xff]
    %v102 = vld [vmem:[#allocation3 + $0x180] sm:$0xff]
    %v103 = vld [vmem:[#allocation3 + $0x188] sm:$0xff]
    %v104 = vld [vmem:[#allocation3 + $0x190] sm:$0xff]
    %v105 = vld [vmem:[#allocation3 + $0x198] sm:$0xff]
    %v106 = vld [vmem:[#allocation3 + $0x1a0] sm:$0xff]
    %v107 = vld [vmem:[#allocation3 + $0x1a8] sm:$0xff]
    %v108 = vld [vmem:[#allocation3 + $0x1b0] sm:$0xff]
    %v109 = vld [vmem:[#allocation3 + $0x1b8] sm:$0xff]
    %v110 = vld [vmem:[#allocation3 + $0x1c0] sm:$0xff]
    %v111 = vld [vmem:[#allocation3 + $0x1c8] sm:$0xff]
    %v112 = vld [vmem:[#allocation3 + $0x1d0] sm:$0xff]
    %v113 = vld [vmem:[#allocation3 + $0x1d8] sm:$0xff]
    %v114 = vld [vmem:[#allocation3 + $0x1e0] sm:$0xff]
    %v115 = vld [vmem:[#allocation3 + $0x1e8] sm:$0xff]
    %v116 = vld [vmem:[#allocation3 + $0x1f0] sm:$0xff]
    %v117 = vld [vmem:[#allocation3 + $0x1f8] sm:$0xff]
    %v118 = vld [vmem:[%s3] sm:$0xff]
    %v120 = vlaneseq
    %v121 = vshrl.u32 %v120, 7
    %v122 = vsub.s32 0, %v121
    %v123 = vrot.slane %v118, %v122
    %v124 = vlaneseq
    %v125 = vshrl.u32 %v124, 7
    %v126 = vsub.s32 1, %v125
    %v127 = vrot.slane %v118, %v126
    %v128 = vlaneseq
    %v129 = vshrl.u32 %v128, 7
    %v130 = vsub.s32 2, %v129
    %v131 = vrot.slane %v118, %v130
    %v132 = vlaneseq
    %v133 = vshrl.u32 %v132, 7
    %v134 = vsub.s32 3, %v133
    %v135 = vrot.slane %v118, %v134
    %v136 = vlaneseq
    %v137 = vshrl.u32 %v136, 7
    %v138 = vsub.s32 4, %v137
    %v139 = vrot.slane %v118, %v138
    %v140 = vlaneseq
    %v141 = vshrl.u32 %v140, 7
    %v142 = vsub.s32 5, %v141
    %v143 = vrot.slane %v118, %v142
    %v144 = vlaneseq
    %v145 = vshrl.u32 %v144, 7
    %v146 = vsub.s32 6, %v145
    %v147 = vrot.slane %v118, %v146
    %v148 = vlaneseq
    %v149 = vshrl.u32 %v148, 7
    %v150 = vsub.s32 7, %v149
    %v151 = vrot.slane %v118, %v150
    %v168 = vunpack.c.l.b16 %v46
    %v169 = vunpack.c.l.b16 %v47
    %v170 = vunpack.c.l.b16 %v48
    %v171 = vunpack.c.l.b16 %v49
    %v172 = vunpack.c.l.b16 %v50
    %v173 = vunpack.c.l.b16 %v51
    %v174 = vunpack.c.l.b16 %v52
    %v175 = vunpack.c.l.b16 %v53
    %v176 = vpack.c.b16 %v169, %v168
    %v177 = vpack.c.b16 %v171, %v170
    %v178 = vpack.c.b16 %v173, %v172
    %v179 = vpack.c.b16 %v175, %v174
    %v248 = vunpack.c.l.b16 %v54
    %v249 = vunpack.c.h.b16 %v54
    %v250 = vunpack.c.l.b16 %v55
    %v251 = vunpack.c.h.b16 %v55
    %v252 = vunpack.c.l.b16 %v56
    %v253 = vunpack.c.h.b16 %v56
    %v254 = vunpack.c.l.b16 %v57
    %v255 = vunpack.c.h.b16 %v57
    %v256 = vunpack.c.l.b16 %v58
    %v257 = vunpack.c.h.b16 %v58
    %v258 = vunpack.c.l.b16 %v59
    %v259 = vunpack.c.h.b16 %v59
    %v260 = vunpack.c.l.b16 %v60
    %v261 = vunpack.c.h.b16 %v60
    %v262 = vunpack.c.l.b16 %v61
    %v263 = vunpack.c.h.b16 %v61
    %v264 = vunpack.c.l.b16 %v62
    %v265 = vunpack.c.h.b16 %v62
    %v266 = vunpack.c.l.b16 %v63
    %v267 = vunpack.c.h.b16 %v63
    %v268 = vunpack.c.l.b16 %v64
    %v269 = vunpack.c.h.b16 %v64
    %v270 = vunpack.c.l.b16 %v65
    %v271 = vunpack.c.h.b16 %v65
    %v272 = vunpack.c.l.b16 %v66
    %v273 = vunpack.c.h.b16 %v66
    %v274 = vunpack.c.l.b16 %v67
    %v275 = vunpack.c.h.b16 %v67
    %v276 = vunpack.c.l.b16 %v68
    %v277 = vunpack.c.h.b16 %v68
    %v278 = vunpack.c.l.b16 %v69
    %v279 = vunpack.c.h.b16 %v69
    %v280 = vunpack.c.l.b16 %v70
    %v281 = vunpack.c.h.b16 %v70
    %v282 = vunpack.c.l.b16 %v71
    %v283 = vunpack.c.h.b16 %v71
    %v284 = vunpack.c.l.b16 %v72
    %v285 = vunpack.c.h.b16 %v72
    %v286 = vunpack.c.l.b16 %v73
    %v287 = vunpack.c.h.b16 %v73
    %v288 = vunpack.c.l.b16 %v74
    %v289 = vunpack.c.h.b16 %v74
    %v290 = vunpack.c.l.b16 %v75
    %v291 = vunpack.c.h.b16 %v75
    %v292 = vunpack.c.l.b16 %v76
    %v293 = vunpack.c.h.b16 %v76
    %v294 = vunpack.c.l.b16 %v77
    %v295 = vunpack.c.h.b16 %v77
    %v296 = vunpack.c.l.b16 %v78
    %v297 = vunpack.c.h.b16 %v78
    %v298 = vunpack.c.l.b16 %v79
    %v299 = vunpack.c.h.b16 %v79
    %v300 = vunpack.c.l.b16 %v80
    %v301 = vunpack.c.h.b16 %v80
    %v302 = vunpack.c.l.b16 %v81
    %v303 = vunpack.c.h.b16 %v81
    %v304 = vunpack.c.l.b16 %v82
    %v305 = vunpack.c.h.b16 %v82
    %v306 = vunpack.c.l.b16 %v83
    %v307 = vunpack.c.h.b16 %v83
    %v308 = vunpack.c.l.b16 %v84
    %v309 = vunpack.c.h.b16 %v84
    %v310 = vunpack.c.l.b16 %v85
    %v311 = vunpack.c.h.b16 %v85
    %v312 = vunpack.c.l.b16 %v86
    %v313 = vunpack.c.h.b16 %v86
    %v314 = vunpack.c.l.b16 %v87
    %v315 = vunpack.c.h.b16 %v87
    %v316 = vunpack.c.l.b16 %v88
    %v317 = vunpack.c.h.b16 %v88
    %v318 = vunpack.c.l.b16 %v89
    %v319 = vunpack.c.h.b16 %v89
    %v320 = vunpack.c.l.b16 %v90
    %v321 = vunpack.c.h.b16 %v90
    %v322 = vunpack.c.l.b16 %v91
    %v323 = vunpack.c.h.b16 %v91
    %v324 = vunpack.c.l.b16 %v92
    %v325 = vunpack.c.h.b16 %v92
    %v326 = vunpack.c.l.b16 %v93
    %v327 = vunpack.c.h.b16 %v93
    %v328 = vunpack.c.l.b16 %v94
    %v329 = vunpack.c.h.b16 %v94
    %v330 = vunpack.c.l.b16 %v95
    %v331 = vunpack.c.h.b16 %v95
    %v332 = vunpack.c.l.b16 %v96
    %v333 = vunpack.c.h.b16 %v96
    %v334 = vunpack.c.l.b16 %v97
    %v335 = vunpack.c.h.b16 %v97
    %v336 = vunpack.c.l.b16 %v98
    %v337 = vunpack.c.h.b16 %v98
    %v338 = vunpack.c.l.b16 %v99
    %v339 = vunpack.c.h.b16 %v99
    %v340 = vunpack.c.l.b16 %v100
    %v341 = vunpack.c.h.b16 %v100
    %v342 = vunpack.c.l.b16 %v101
    %v343 = vunpack.c.h.b16 %v101
    %v344 = vunpack.c.l.b16 %v102
    %v345 = vunpack.c.h.b16 %v102
    %v346 = vunpack.c.l.b16 %v103
    %v347 = vunpack.c.h.b16 %v103
    %v348 = vunpack.c.l.b16 %v104
    %v349 = vunpack.c.h.b16 %v104
    %v350 = vunpack.c.l.b16 %v105
    %v351 = vunpack.c.h.b16 %v105
    %v352 = vunpack.c.l.b16 %v106
    %v353 = vunpack.c.h.b16 %v106
    %v354 = vunpack.c.l.b16 %v107
    %v355 = vunpack.c.h.b16 %v107
    %v356 = vunpack.c.l.b16 %v108
    %v357 = vunpack.c.h.b16 %v108
    %v358 = vunpack.c.l.b16 %v109
    %v359 = vunpack.c.h.b16 %v109
    %v360 = vunpack.c.l.b16 %v110
    %v361 = vunpack.c.h.b16 %v110
    %v362 = vunpack.c.l.b16 %v111
    %v363 = vunpack.c.h.b16 %v111
    %v364 = vunpack.c.l.b16 %v112
    %v365 = vunpack.c.h.b16 %v112
    %v366 = vunpack.c.l.b16 %v113
    %v367 = vunpack.c.h.b16 %v113
    %v368 = vunpack.c.l.b16 %v114
    %v369 = vunpack.c.h.b16 %v114
    %v370 = vunpack.c.l.b16 %v115
    %v371 = vunpack.c.h.b16 %v115
    %v372 = vunpack.c.l.b16 %v116
    %v373 = vunpack.c.h.b16 %v116
    %v374 = vunpack.c.l.b16 %v117
    %v375 = vunpack.c.h.b16 %v117
    %v376 = vpack.c.b16 %v256, %v248
    %v377 = vpack.c.b16 %v257, %v249
    %v378 = vpack.c.b16 %v258, %v250
    %v379 = vpack.c.b16 %v259, %v251
    %v380 = vpack.c.b16 %v260, %v252
    %v381 = vpack.c.b16 %v261, %v253
    %v382 = vpack.c.b16 %v262, %v254
    %v383 = vpack.c.b16 %v263, %v255
    %v384 = vpack.c.b16 %v272, %v264
    %v385 = vpack.c.b16 %v273, %v265
    %v386 = vpack.c.b16 %v274, %v266
    %v387 = vpack.c.b16 %v275, %v267
    %v388 = vpack.c.b16 %v276, %v268
    %v389 = vpack.c.b16 %v277, %v269
    %v390 = vpack.c.b16 %v278, %v270
    %v391 = vpack.c.b16 %v279, %v271
    %v392 = vpack.c.b16 %v288, %v280
    %v393 = vpack.c.b16 %v289, %v281
    %v394 = vpack.c.b16 %v290, %v282
    %v395 = vpack.c.b16 %v291, %v283
    %v396 = vpack.c.b16 %v292, %v284
    %v397 = vpack.c.b16 %v293, %v285
    %v398 = vpack.c.b16 %v294, %v286
    %v399 = vpack.c.b16 %v295, %v287
    %v400 = vpack.c.b16 %v304, %v296
    %v401 = vpack.c.b16 %v305, %v297
    %v402 = vpack.c.b16 %v306, %v298
    %v403 = vpack.c.b16 %v307, %v299
    %v404 = vpack.c.b16 %v308, %v300
    %v405 = vpack.c.b16 %v309, %v301
    %v406 = vpack.c.b16 %v310, %v302
    %v407 = vpack.c.b16 %v311, %v303
    %v408 = vpack.c.b16 %v320, %v312
    %v409 = vpack.c.b16 %v321, %v313
    %v410 = vpack.c.b16 %v322, %v314
    %v411 = vpack.c.b16 %v323, %v315
    %v412 = vpack.c.b16 %v324, %v316
    %v413 = vpack.c.b16 %v325, %v317
    %v414 = vpack.c.b16 %v326, %v318
    %v415 = vpack.c.b16 %v327, %v319
    %v416 = vpack.c.b16 %v336, %v328
    %v417 = vpack.c.b16 %v337, %v329
    %v418 = vpack.c.b16 %v338, %v330
    %v419 = vpack.c.b16 %v339, %v331
    %v420 = vpack.c.b16 %v340, %v332
    %v421 = vpack.c.b16 %v341, %v333
    %v422 = vpack.c.b16 %v342, %v334
    %v423 = vpack.c.b16 %v343, %v335
    %v424 = vpack.c.b16 %v352, %v344
    %v425 = vpack.c.b16 %v353, %v345
    %v426 = vpack.c.b16 %v354, %v346
    %v427 = vpack.c.b16 %v355, %v347
    %v428 = vpack.c.b16 %v356, %v348
    %v429 = vpack.c.b16 %v357, %v349
    %v430 = vpack.c.b16 %v358, %v350
    %v431 = vpack.c.b16 %v359, %v351
    %v432 = vpack.c.b16 %v368, %v360
    %v433 = vpack.c.b16 %v369, %v361
    %v434 = vpack.c.b16 %v370, %v362
    %v435 = vpack.c.b16 %v371, %v363
    %v436 = vpack.c.b16 %v372, %v364
    %v437 = vpack.c.b16 %v373, %v365
    %v438 = vpack.c.b16 %v374, %v366
    %v439 = vpack.c.b16 %v375, %v367
    %504 = vmatprep.subr.bf16.mxu0 %v377
    %505 = vmatpush1.bf16.msra.mxu0 %v376
    %506 = vmatprep.subr.bf16.mxu0 %v385
    %507 = vmatpush1.bf16.msra.mxu0 %v384
    %508 = vmatprep.subr.bf16.mxu0 %v393
    %509 = vmatpush1.bf16.msra.mxu0 %v392
    %510 = vmatprep.subr.bf16.mxu0 %v401
    %511 = vmatpush1.bf16.msra.mxu0 %v400
    %512 = vmatprep.subr.bf16.mxu0 %v409
    %513 = vmatpush1.bf16.msra.mxu0 %v408
    %514 = vmatprep.subr.bf16.mxu0 %v417
    %515 = vmatpush1.bf16.msra.mxu0 %v416
    %516 = vmatprep.subr.bf16.mxu0 %v425
    %517 = vmatpush1.bf16.msra.mxu0 %v424
    %518 = vmatprep.subr.bf16.mxu0 %v433
    %519 = vmatpush1.bf16.msra.mxu0 %v432
    %520 = vmatprep.subr.bf16.mxu0 0
    %521 = vmatpush1.bf16.msra.mxu0 0
    %522 = vmatprep.subr.bf16.mxu0 0
    %523 = vmatpush1.bf16.msra.mxu0 0
    %524 = vmatprep.subr.bf16.mxu0 0
    %525 = vmatpush1.bf16.msra.mxu0 0
    %526 = vmatprep.subr.bf16.mxu0 0
    %527 = vmatpush1.bf16.msra.mxu0 0
    %528 = vmatprep.subr.bf16.mxu0 0
    %529 = vmatpush1.bf16.msra.mxu0 0
    %530 = vmatprep.subr.bf16.mxu0 0
    %531 = vmatpush1.bf16.msra.mxu0 0
    %532 = vmatprep.subr.bf16.mxu0 0
    %533 = vmatpush1.bf16.msra.mxu0 0
    %534 = vmatprep.subr.bf16.mxu0 0
    %535 = vmatpush1.bf16.msra.mxu0 0
    %536 = vmatprep.mubr.bf16.mxu0 0
    %537 = vmatmul.mubr.bf16.gmra.mrb[0].mxu0 %v176
    %v538 = vpop.f32.mrb[0].mxu0
    %v539 = vadd.f32 %v123, %v538
    %v540 = vpop.f32.mrb[0].mxu0
    %v541 = vadd.f32 %v127, %v540
    %v542 = vpop.f32.mrb[0].mxu0
    %v543 = vadd.f32 %v123, %v542
    %v544 = vpop.f32.mrb[0].mxu0
    %v545 = vadd.f32 %v127, %v544
    %546 = vmatprep.mubr.bf16.mxu0 0
    %547 = vmatmul.mubr.bf16.gmra.mrb[0].mxu0 %v177
    %v548 = vpop.f32.mrb[0].mxu0
    %v549 = vadd.f32 %v123, %v548
    %v550 = vpop.f32.mrb[0].mxu0
    %v551 = vadd.f32 %v127, %v550
    %v552 = vpop.f32.mrb[0].mxu0
    %v553 = vadd.f32 %v123, %v552
    %v554 = vpop.f32.mrb[0].mxu0
    %v555 = vadd.f32 %v127, %v554
    %556 = vmatprep.mubr.bf16.mxu0 0
    %557 = vmatmul.mubr.bf16.gmra.mrb[0].mxu0 %v178
    %v558 = vpop.f32.mrb[0].mxu0
    %v559 = vadd.f32 %v123, %v558
    %v560 = vpop.f32.mrb[0].mxu0
    %v561 = vadd.f32 %v127, %v560
    %v562 = vpop.f32.mrb[0].mxu0
    %v563 = vadd.f32 %v123, %v562
    %v564 = vpop.f32.mrb[0].mxu0
    %v565 = vadd.f32 %v127, %v564
    %566 = vmatprep.mubr.bf16.mxu0 0
    %567 = vmatmul.mubr.bf16.gmra.mrb[0].mxu0 %v179
    %v568 = vpop.f32.mrb[0].mxu0
    %v569 = vadd.f32 %v123, %v568
    %v570 = vpop.f32.mrb[0].mxu0
    %v571 = vadd.f32 %v127, %v570
    %v572 = vpop.f32.mrb[0].mxu0
    %v573 = vadd.f32 %v123, %v572
    %v574 = vpop.f32.mrb[0].mxu0
    %v575 = vadd.f32 %v127, %v574
    %576 = vdwg.mxu0
    %577 = vmatprep.subr.bf16.mxu0 %v379
    %578 = vmatpush1.bf16.msra.mxu0 %v378
    %579 = vmatprep.subr.bf16.mxu0 %v387
    %580 = vmatpush1.bf16.msra.mxu0 %v386
    %581 = vmatprep.subr.bf16.mxu0 %v395
    %582 = vmatpush1.bf16.msra.mxu0 %v394
    %583 = vmatprep.subr.bf16.mxu0 %v403
    %584 = vmatpush1.bf16.msra.mxu0 %v402
    %585 = vmatprep.subr.bf16.mxu0 %v411
    %586 = vmatpush1.bf16.msra.mxu0 %v410
    %587 = vmatprep.subr.bf16.mxu0 %v419
    %588 = vmatpush1.bf16.msra.mxu0 %v418
    %589 = vmatprep.subr.bf16.mxu0 %v427
    %590 = vmatpush1.bf16.msra.mxu0 %v426
    %591 = vmatprep.subr.bf16.mxu0 %v435
    %592 = vmatpush1.bf16.msra.mxu0 %v434
    %593 = vmatprep.subr.bf16.mxu0 0
    %594 = vmatpush1.bf16.msra.mxu0 0
    %595 = vmatprep.subr.bf16.mxu0 0
    %596 = vmatpush1.bf16.msra.mxu0 0
    %597 = vmatprep.subr.bf16.mxu0 0
    %598 = vmatpush1.bf16.msra.mxu0 0
    %599 = vmatprep.subr.bf16.mxu0 0
    %600 = vmatpush1.bf16.msra.mxu0 0
    %601 = vmatprep.subr.bf16.mxu0 0
    %602 = vmatpush1.bf16.msra.mxu0 0
    %603 = vmatprep.subr.bf16.mxu0 0
    %604 = vmatpush1.bf16.msra.mxu0 0
    %605 = vmatprep.subr.bf16.mxu0 0
    %606 = vmatpush1.bf16.msra.mxu0 0
    %607 = vmatprep.subr.bf16.mxu0 0
    %608 = vmatpush1.bf16.msra.mxu0 0
    %609 = vmatprep.mubr.bf16.mxu0 0
    %610 = vmatmul.mubr.bf16.gmra.mrb[0].mxu0 %v176
    %v611 = vpop.f32.mrb[0].mxu0
    %v612 = vadd.f32 %v131, %v611
    %v613 = vpop.f32.mrb[0].mxu0
    %v614 = vadd.f32 %v135, %v613
    %v615 = vpop.f32.mrb[0].mxu0
    %v616 = vadd.f32 %v131, %v615
    %v617 = vpop.f32.mrb[0].mxu0
    %v618 = vadd.f32 %v135, %v617
    %619 = vmatprep.mubr.bf16.mxu0 0
    %620 = vmatmul.mubr.bf16.gmra.mrb[0].mxu0 %v177
    %v621 = vpop.f32.mrb[0].mxu0
    %v622 = vadd.f32 %v131, %v621
    %v623 = vpop.f32.mrb[0].mxu0
    %v624 = vadd.f32 %v135, %v623
    %v625 = vpop.f32.mrb[0].mxu0
    %v626 = vadd.f32 %v131, %v625
    %v627 = vpop.f32.mrb[0].mxu0
    %v628 = vadd.f32 %v135, %v627
    %629 = vmatprep.mubr.bf16.mxu0 0
    %630 = vmatmul.mubr.bf16.gmra.mrb[0].mxu0 %v178
    %v631 = vpop.f32.mrb[0].mxu0
    %v632 = vadd.f32 %v131, %v631
    %v633 = vpop.f32.mrb[0].mxu0
    %v634 = vadd.f32 %v135, %v633
    %v635 = vpop.f32.mrb[0].mxu0
    %v636 = vadd.f32 %v131, %v635
    %v637 = vpop.f32.mrb[0].mxu0
    %v638 = vadd.f32 %v135, %v637
    %639 = vmatprep.mubr.bf16.mxu0 0
    %640 = vmatmul.mubr.bf16.gmra.mrb[0].mxu0 %v179
    %v641 = vpop.f32.mrb[0].mxu0
    %v642 = vadd.f32 %v131, %v641
    %v643 = vpop.f32.mrb[0].mxu0
    %v644 = vadd.f32 %v135, %v643
    %v645 = vpop.f32.mrb[0].mxu0
    %v646 = vadd.f32 %v131, %v645
    %v647 = vpop.f32.mrb[0].mxu0
    %v648 = vadd.f32 %v135, %v647
    %649 = vdwg.mxu0
    %650 = vmatprep.subr.bf16.mxu0 %v381
    %651 = vmatpush1.bf16.msra.mxu0 %v380
    %652 = vmatprep.subr.bf16.mxu0 %v389
    %653 = vmatpush1.bf16.msra.mxu0 %v388
    %654 = vmatprep.subr.bf16.mxu0 %v397
    %655 = vmatpush1.bf16.msra.mxu0 %v396
    %656 = vmatprep.subr.bf16.mxu0 %v405
    %657 = vmatpush1.bf16.msra.mxu0 %v404
    %658 = vmatprep.subr.bf16.mxu0 %v413
    %659 = vmatpush1.bf16.msra.mxu0 %v412
    %660 = vmatprep.subr.bf16.mxu0 %v421
    %661 = vmatpush1.bf16.msra.mxu0 %v420
    %662 = vmatprep.subr.bf16.mxu0 %v429
    %663 = vmatpush1.bf16.msra.mxu0 %v428
    %664 = vmatprep.subr.bf16.mxu0 %v437
    %665 = vmatpush1.bf16.msra.mxu0 %v436
    %666 = vmatprep.subr.bf16.mxu0 0
    %667 = vmatpush1.bf16.msra.mxu0 0
    %668 = vmatprep.subr.bf16.mxu0 0
    %669 = vmatpush1.bf16.msra.mxu0 0
    %670 = vmatprep.subr.bf16.mxu0 0
    %671 = vmatpush1.bf16.msra.mxu0 0
    %672 = vmatprep.subr.bf16.mxu0 0
    %673 = vmatpush1.bf16.msra.mxu0 0
    %674 = vmatprep.subr.bf16.mxu0 0
    %675 = vmatpush1.bf16.msra.mxu0 0
    %676 = vmatprep.subr.bf16.mxu0 0
    %677 = vmatpush1.bf16.msra.mxu0 0
    %678 = vmatprep.subr.bf16.mxu0 0
    %679 = vmatpush1.bf16.msra.mxu0 0
    %680 = vmatprep.subr.bf16.mxu0 0
    %681 = vmatpush1.bf16.msra.mxu0 0
    %682 = vmatprep.mubr.bf16.mxu0 0
    %683 = vmatmul.mubr.bf16.gmra.mrb[0].mxu0 %v176
    %v684 = vpop.f32.mrb[0].mxu0
    %v685 = vadd.f32 %v139, %v684
    %v686 = vpop.f32.mrb[0].mxu0
    %v687 = vadd.f32 %v143, %v686
    %v688 = vpop.f32.mrb[0].mxu0
    %v689 = vadd.f32 %v139, %v688
    %v690 = vpop.f32.mrb[0].mxu0
    %v691 = vadd.f32 %v143, %v690
    %692 = vmatprep.mubr.bf16.mxu0 0
    %693 = vmatmul.mubr.bf16.gmra.mrb[0].mxu0 %v177
    %v694 = vpop.f32.mrb[0].mxu0
    %v695 = vadd.f32 %v139, %v694
    %v696 = vpop.f32.mrb[0].mxu0
    %v697 = vadd.f32 %v143, %v696
    %v698 = vpop.f32.mrb[0].mxu0
    %v699 = vadd.f32 %v139, %v698
    %v700 = vpop.f32.mrb[0].mxu0
    %v701 = vadd.f32 %v143, %v700
    %702 = vmatprep.mubr.bf16.mxu0 0
    %703 = vmatmul.mubr.bf16.gmra.mrb[0].mxu0 %v178
    %v704 = vpop.f32.mrb[0].mxu0
    %v705 = vadd.f32 %v139, %v704
    %v706 = vpop.f32.mrb[0].mxu0
    %v707 = vadd.f32 %v143, %v706
    %v708 = vpop.f32.mrb[0].mxu0
    %v709 = vadd.f32 %v139, %v708
    %v710 = vpop.f32.mrb[0].mxu0
    %v711 = vadd.f32 %v143, %v710
    %712 = vmatprep.mubr.bf16.mxu0 0
    %713 = vmatmul.mubr.bf16.gmra.mrb[0].mxu0 %v179
    %v714 = vpop.f32.mrb[0].mxu0
    %v715 = vadd.f32 %v139, %v714
    %v716 = vpop.f32.mrb[0].mxu0
    %v717 = vadd.f32 %v143, %v716
    %v718 = vpop.f32.mrb[0].mxu0
    %v719 = vadd.f32 %v139, %v718
    %v720 = vpop.f32.mrb[0].mxu0
    %v721 = vadd.f32 %v143, %v720
    %722 = vdwg.mxu0
    %723 = vmatprep.subr.bf16.mxu0 %v383
    %724 = vmatpush1.bf16.msra.mxu0 %v382
    %725 = vmatprep.subr.bf16.mxu0 %v391
    %726 = vmatpush1.bf16.msra.mxu0 %v390
    %727 = vmatprep.subr.bf16.mxu0 %v399
    %728 = vmatpush1.bf16.msra.mxu0 %v398
    %729 = vmatprep.subr.bf16.mxu0 %v407
    %730 = vmatpush1.bf16.msra.mxu0 %v406
    %731 = vmatprep.subr.bf16.mxu0 %v415
    %732 = vmatpush1.bf16.msra.mxu0 %v414
    %733 = vmatprep.subr.bf16.mxu0 %v423
    %734 = vmatpush1.bf16.msra.mxu0 %v422
    %735 = vmatprep.subr.bf16.mxu0 %v431
    %736 = vmatpush1.bf16.msra.mxu0 %v430
    %737 = vmatprep.subr.bf16.mxu0 %v439
    %738 = vmatpush1.bf16.msra.mxu0 %v438
    %739 = vmatprep.subr.bf16.mxu0 0
    %740 = vmatpush1.bf16.msra.mxu0 0
    %741 = vmatprep.subr.bf16.mxu0 0
    %742 = vmatpush1.bf16.msra.mxu0 0
    %743 = vmatprep.subr.bf16.mxu0 0
    %744 = vmatpush1.bf16.msra.mxu0 0
    %745 = vmatprep.subr.bf16.mxu0 0
    %746 = vmatpush1.bf16.msra.mxu0 0
    %747 = vmatprep.subr.bf16.mxu0 0
    %748 = vmatpush1.bf16.msra.mxu0 0
    %749 = vmatprep.subr.bf16.mxu0 0
    %750 = vmatpush1.bf16.msra.mxu0 0
    %751 = vmatprep.subr.bf16.mxu0 0
    %752 = vmatpush1.bf16.msra.mxu0 0
    %753 = vmatprep.subr.bf16.mxu0 0
    %754 = vmatpush1.bf16.msra.mxu0 0
    %755 = vmatprep.mubr.bf16.mxu0 0
    %756 = vmatmul.mubr.bf16.gmra.mrb[0].mxu0 %v176
    %v757 = vpop.f32.mrb[0].mxu0
    %v758 = vadd.f32 %v147, %v757
    %v759 = vpop.f32.mrb[0].mxu0
    %v760 = vadd.f32 %v151, %v759
    %v761 = vpop.f32.mrb[0].mxu0
    %v762 = vadd.f32 %v147, %v761
    %v763 = vpop.f32.mrb[0].mxu0
    %v764 = vadd.f32 %v151, %v763
    %765 = vmatprep.mubr.bf16.mxu0 0
    %766 = vmatmul.mubr.bf16.gmra.mrb[0].mxu0 %v177
    %v767 = vpop.f32.mrb[0].mxu0
    %v768 = vadd.f32 %v147, %v767
    %v769 = vpop.f32.mrb[0].mxu0
    %v770 = vadd.f32 %v151, %v769
    %v771 = vpop.f32.mrb[0].mxu0
    %v772 = vadd.f32 %v147, %v771
    %v773 = vpop.f32.mrb[0].mxu0
    %v774 = vadd.f32 %v151, %v773
    %775 = vmatprep.mubr.bf16.mxu0 0
    %776 = vmatmul.mubr.bf16.gmra.mrb[0].mxu0 %v178
    %v777 = vpop.f32.mrb[0].mxu0
    %v778 = vadd.f32 %v147, %v777
    %v779 = vpop.f32.mrb[0].mxu0
    %v780 = vadd.f32 %v151, %v779
    %v781 = vpop.f32.mrb[0].mxu0
    %v782 = vadd.f32 %v147, %v781
    %v783 = vpop.f32.mrb[0].mxu0
    %v784 = vadd.f32 %v151, %v783
    %785 = vmatprep.mubr.bf16.mxu0 0
    %786 = vmatmul.mubr.bf16.gmra.mrb[0].mxu0 %v179
    %v787 = vpop.f32.mrb[0].mxu0
    %v788 = vadd.f32 %v147, %v787
    %v789 = vpop.f32.mrb[0].mxu0
    %v790 = vadd.f32 %v151, %v789
    %v791 = vpop.f32.mrb[0].mxu0
    %v792 = vadd.f32 %v147, %v791
    %v793 = vpop.f32.mrb[0].mxu0
    %v794 = vadd.f32 %v151, %v793
    %795 = vdwg.mxu0
    %796 = vst [vmem:[#allocation2] sm:$0xff] %v539
    %797 = vst [vmem:[#allocation2 + $0x8] sm:$0xff] %v541
    %798 = vst [vmem:[#allocation2 + $0x10] sm:$0xff] %v612
    %799 = vst [vmem:[#allocation2 + $0x18] sm:$0xff] %v614
    %800 = vst [vmem:[#allocation2 + $0x20] sm:$0xff] %v685
    %801 = vst [vmem:[#allocation2 + $0x28] sm:$0xff] %v687
    %802 = vst [vmem:[#allocation2 + $0x30] sm:$0xff] %v758
    %803 = vst [vmem:[#allocation2 + $0x38] sm:$0xff] %v760
    %804 = vst [vmem:[#allocation2 + $0x40] sm:$0xff] %v543
    %805 = vst [vmem:[#allocation2 + $0x48] sm:$0xff] %v545
    %806 = vst [vmem:[#allocation2 + $0x50] sm:$0xff] %v616
    %807 = vst [vmem:[#allocation2 + $0x58] sm:$0xff] %v618
    %808 = vst [vmem:[#allocation2 + $0x60] sm:$0xff] %v689
    %809 = vst [vmem:[#allocation2 + $0x68] sm:$0xff] %v691
    %810 = vst [vmem:[#allocation2 + $0x70] sm:$0xff] %v762
    %811 = vst [vmem:[#allocation2 + $0x78] sm:$0xff] %v764
    %812 = vst [vmem:[#allocation2 + $0x80] sm:$0xff] %v549
    %813 = vst [vmem:[#allocation2 + $0x88] sm:$0xff] %v551
    %814 = vst [vmem:[#allocation2 + $0x90] sm:$0xff] %v622
    %815 = vst [vmem:[#allocation2 + $0x98] sm:$0xff] %v624
    %816 = vst [vmem:[#allocation2 + $0xa0] sm:$0xff] %v695
    %817 = vst [vmem:[#allocation2 + $0xa8] sm:$0xff] %v697
    %818 = vst [vmem:[#allocation2 + $0xb0] sm:$0xff] %v768
    %819 = vst [vmem:[#allocation2 + $0xb8] sm:$0xff] %v770
    %820 = vst [vmem:[#allocation2 + $0xc0] sm:$0xff] %v553
    %821 = vst [vmem:[#allocation2 + $0xc8] sm:$0xff] %v555
    %822 = vst [vmem:[#allocation2 + $0xd0] sm:$0xff] %v626
    %823 = vst [vmem:[#allocation2 + $0xd8] sm:$0xff] %v628
    %824 = vst [vmem:[#allocation2 + $0xe0] sm:$0xff] %v699
    %825 = vst [vmem:[#allocation2 + $0xe8] sm:$0xff] %v701
    %826 = vst [vmem:[#allocation2 + $0xf0] sm:$0xff] %v772
    %827 = vst [vmem:[#allocation2 + $0xf8] sm:$0xff] %v774
    %828 = vst [vmem:[#allocation2 + $0x100] sm:$0xff] %v559
    %829 = vst [vmem:[#allocation2 + $0x108] sm:$0xff] %v561
    %830 = vst [vmem:[#allocation2 + $0x110] sm:$0xff] %v632
    %831 = vst [vmem:[#allocation2 + $0x118] sm:$0xff] %v634
    %832 = vst [vmem:[#allocation2 + $0x120] sm:$0xff] %v705
    %833 = vst [vmem:[#allocation2 + $0x128] sm:$0xff] %v707
    %834 = vst [vmem:[#allocation2 + $0x130] sm:$0xff] %v778
    %835 = vst [vmem:[#allocation2 + $0x138] sm:$0xff] %v780
    %836 = vst [vmem:[#allocation2 + $0x140] sm:$0xff] %v563
    %837 = vst [vmem:[#allocation2 + $0x148] sm:$0xff] %v565
    %838 = vst [vmem:[#allocation2 + $0x150] sm:$0xff] %v636
    %839 = vst [vmem:[#allocation2 + $0x158] sm:$0xff] %v638
    %840 = vst [vmem:[#allocation2 + $0x160] sm:$0xff] %v709
    %841 = vst [vmem:[#allocation2 + $0x168] sm:$0xff] %v711
    %842 = vst [vmem:[#allocation2 + $0x170] sm:$0xff] %v782
    %843 = vst [vmem:[#allocation2 + $0x178] sm:$0xff] %v784
    %844 = vst [vmem:[#allocation2 + $0x180] sm:$0xff] %v569
    %845 = vst [vmem:[#allocation2 + $0x188] sm:$0xff] %v571
    %846 = vst [vmem:[#allocation2 + $0x190] sm:$0xff] %v642
    %847 = vst [vmem:[#allocation2 + $0x198] sm:$0xff] %v644
    %848 = vst [vmem:[#allocation2 + $0x1a0] sm:$0xff] %v715
    %849 = vst [vmem:[#allocation2 + $0x1a8] sm:$0xff] %v717
    %850 = vst [vmem:[#allocation2 + $0x1b0] sm:$0xff] %v788
    %851 = vst [vmem:[#allocation2 + $0x1b8] sm:$0xff] %v790
    %852 = vst [vmem:[#allocation2 + $0x1c0] sm:$0xff] %v573
    %853 = vst [vmem:[#allocation2 + $0x1c8] sm:$0xff] %v575
    %854 = vst [vmem:[#allocation2 + $0x1d0] sm:$0xff] %v646
    %855 = vst [vmem:[#allocation2 + $0x1d8] sm:$0xff] %v648
    %856 = vst [vmem:[#allocation2 + $0x1e0] sm:$0xff] %v719
    %857 = vst [vmem:[#allocation2 + $0x1e8] sm:$0xff] %v721
    %858 = vst [vmem:[#allocation2 + $0x1f0] sm:$0xff] %v792
    %859 = vst [vmem:[#allocation2 + $0x1f8] sm:$0xff] %v794
    %v860 = vld [vmem:[#allocation5] sm:$0xff]
    %v861 = vld [vmem:[#allocation5 + $0x8] sm:$0xff]
    %v862 = vld [vmem:[#allocation5 + $0x10] sm:$0xff]
    %v863 = vld [vmem:[#allocation5 + $0x18] sm:$0xff]
    %v864 = vld [vmem:[#allocation5 + $0x20] sm:$0xff]
    %v865 = vld [vmem:[#allocation5 + $0x28] sm:$0xff]
    %v866 = vld [vmem:[#allocation5 + $0x30] sm:$0xff]
    %v867 = vld [vmem:[#allocation5 + $0x38] sm:$0xff]
    %v868 = vld [vmem:[#allocation5 + $0x40] sm:$0xff]
    %v869 = vld [vmem:[#allocation5 + $0x48] sm:$0xff]
    %v870 = vld [vmem:[#allocation5 + $0x50] sm:$0xff]
    %v871 = vld [vmem:[#allocation5 + $0x58] sm:$0xff]
    %v872 = vld [vmem:[#allocation5 + $0x60] sm:$0xff]
    %v873 = vld [vmem:[#allocation5 + $0x68] sm:$0xff]
    %v874 = vld [vmem:[#allocation5 + $0x70] sm:$0xff]
    %v875 = vld [vmem:[#allocation5 + $0x78] sm:$0xff]
    %v876 = vld [vmem:[#allocation5 + $0x80] sm:$0xff]
    %v877 = vld [vmem:[#allocation5 + $0x88] sm:$0xff]
    %v878 = vld [vmem:[#allocation5 + $0x90] sm:$0xff]
    %v879 = vld [vmem:[#allocation5 + $0x98] sm:$0xff]
    %v880 = vld [vmem:[#allocation5 + $0xa0] sm:$0xff]
    %v881 = vld [vmem:[#allocation5 + $0xa8] sm:$0xff]
    %v882 = vld [vmem:[#allocation5 + $0xb0] sm:$0xff]
    %v883 = vld [vmem:[#allocation5 + $0xb8] sm:$0xff]
    %v884 = vld [vmem:[#allocation5 + $0xc0] sm:$0xff]
    %v885 = vld [vmem:[#allocation5 + $0xc8] sm:$0xff]
    %v886 = vld [vmem:[#allocation5 + $0xd0] sm:$0xff]
    %v887 = vld [vmem:[#allocation5 + $0xd8] sm:$0xff]
    %v888 = vld [vmem:[#allocation5 + $0xe0] sm:$0xff]
    %v889 = vld [vmem:[#allocation5 + $0xe8] sm:$0xff]
    %v890 = vld [vmem:[#allocation5 + $0xf0] sm:$0xff]
    %v891 = vld [vmem:[#allocation5 + $0xf8] sm:$0xff]
    %v892 = vld [vmem:[#allocation5 + $0x100] sm:$0xff]
    %v893 = vld [vmem:[#allocation5 + $0x108] sm:$0xff]
    %v894 = vld [vmem:[#allocation5 + $0x110] sm:$0xff]
    %v895 = vld [vmem:[#allocation5 + $0x118] sm:$0xff]
    %v896 = vld [vmem:[#allocation5 + $0x120] sm:$0xff]
    %v897 = vld [vmem:[#allocation5 + $0x128] sm:$0xff]
    %v898 = vld [vmem:[#allocation5 + $0x130] sm:$0xff]
    %v899 = vld [vmem:[#allocation5 + $0x138] sm:$0xff]
    %v900 = vld [vmem:[#allocation5 + $0x140] sm:$0xff]
    %v901 = vld [vmem:[#allocation5 + $0x148] sm:$0xff]
    %v902 = vld [vmem:[#allocation5 + $0x150] sm:$0xff]
    %v903 = vld [vmem:[#allocation5 + $0x158] sm:$0xff]
    %v904 = vld [vmem:[#allocation5 + $0x160] sm:$0xff]
    %v905 = vld [vmem:[#allocation5 + $0x168] sm:$0xff]
    %v906 = vld [vmem:[#allocation5 + $0x170] sm:$0xff]
    %v907 = vld [vmem:[#allocation5 + $0x178] sm:$0xff]
    %v908 = vld [vmem:[#allocation5 + $0x180] sm:$0xff]
    %v909 = vld [vmem:[#allocation5 + $0x188] sm:$0xff]
    %v910 = vld [vmem:[#allocation5 + $0x190] sm:$0xff]
    %v911 = vld [vmem:[#allocation5 + $0x198] sm:$0xff]
    %v912 = vld [vmem:[#allocation5 + $0x1a0] sm:$0xff]
    %v913 = vld [vmem:[#allocation5 + $0x1a8] sm:$0xff]
    %v914 = vld [vmem:[#allocation5 + $0x1b0] sm:$0xff]
    %v915 = vld [vmem:[#allocation5 + $0x1b8] sm:$0xff]
    %v916 = vld [vmem:[#allocation5 + $0x1c0] sm:$0xff]
    %v917 = vld [vmem:[#allocation5 + $0x1c8] sm:$0xff]
    %v918 = vld [vmem:[#allocation5 + $0x1d0] sm:$0xff]
    %v919 = vld [vmem:[#allocation5 + $0x1d8] sm:$0xff]
    %v920 = vld [vmem:[#allocation5 + $0x1e0] sm:$0xff]
    %v921 = vld [vmem:[#allocation5 + $0x1e8] sm:$0xff]
    %v922 = vld [vmem:[#allocation5 + $0x1f0] sm:$0xff]
    %v923 = vld [vmem:[#allocation5 + $0x1f8] sm:$0xff]
    %v924 = vlaneseq
    %v925 = vshrl.u32 %v924, 7
    %v926 = vadd.s32 %v925, 8
    %vm927 = vcmp.lt.s32.totalorder %v925, 8
    %vm928 = vcmp.lt.s32.totalorder %v926, 8
    %v929 = vsel %vm927, 1, 0
    %v930 = vsel %vm928, 1, 0
    %v931 = vcvt.s32.f32 %v929
    %v932 = vcvt.s32.f32 %v930
    %v933 = vsub.f32 1.0, %v931
    %v934 = vsub.f32 1.0, %v932
    %s935 = smul.u32 0, 8
    %s936 = smul.addr %s935, 8
    %s937 = scalar_lea.vmem [#allocation2], %s936
    %v938 = vld [vmem:[%s937] sm:$0xff]
    %v939 = vld [vmem:[%s937 + $0x8] sm:$0xff]
    %v940 = vld [vmem:[%s937 + $0x10] sm:$0xff]
    %v941 = vld [vmem:[%s937 + $0x18] sm:$0xff]
    %s942 = smul.u32 7, 8
    %s943 = smul.addr %s942, 8
    %s944 = scalar_lea.vmem [#allocation2], %s943
    %v945 = vld [vmem:[%s944 + $0x20] sm:$0xff]
    %v946 = vld [vmem:[%s944 + $0x28] sm:$0xff]
    %v947 = vld [vmem:[%s944 + $0x30] sm:$0xff]
    %v948 = vld [vmem:[%s944 + $0x38] sm:$0xff]
    %v949 = vmul.f32 %v931, 0.0
    %v950 = vmul.f32 %v932, 0.0
    %v951 = vmul.f32 %v933, 0.0
    %v952 = vmul.f32 %v934, 0.0
    %v953 = vpack.c.bf16 %v950, %v949
    %v954 = vpack.c.bf16 %v952, %v951
    %v1019 = vunpack.c.l.b16 %v860
    %v1020 = vunpack.c.h.b16 %v860
    %v1021 = vunpack.c.l.b16 %v861
    %v1022 = vunpack.c.h.b16 %v861
    %v1023 = vunpack.c.l.b16 %v862
    %v1024 = vunpack.c.h.b16 %v862
    %v1025 = vunpack.c.l.b16 %v863
    %v1026 = vunpack.c.h.b16 %v863
    %v1027 = vunpack.c.l.b16 %v864
    %v1028 = vunpack.c.h.b16 %v864
    %v1029 = vunpack.c.l.b16 %v865
    %v1030 = vunpack.c.h.b16 %v865
    %v1031 = vunpack.c.l.b16 %v866
    %v1032 = vunpack.c.h.b16 %v866
    %v1033 = vunpack.c.l.b16 %v867
    %v1034 = vunpack.c.h.b16 %v867
    %v1035 = vunpack.c.l.b16 %v868
    %v1036 = vunpack.c.h.b16 %v868
    %v1037 = vunpack.c.l.b16 %v869
    %v1038 = vunpack.c.h.b16 %v869
    %v1039 = vunpack.c.l.b16 %v870
    %v1040 = vunpack.c.h.b16 %v870
    %v1041 = vunpack.c.l.b16 %v871
    %v1042 = vunpack.c.h.b16 %v871
    %v1043 = vunpack.c.l.b16 %v872
    %v1044 = vunpack.c.h.b16 %v872
    %v1045 = vunpack.c.l.b16 %v873
    %v1046 = vunpack.c.h.b16 %v873
    %v1047 = vunpack.c.l.b16 %v874
    %v1048 = vunpack.c.h.b16 %v874
    %v1049 = vunpack.c.l.b16 %v875
    %v1050 = vunpack.c.h.b16 %v875
    %v1051 = vunpack.c.l.b16 %v876
    %v1052 = vunpack.c.h.b16 %v876
    %v1053 = vunpack.c.l.b16 %v877
    %v1054 = vunpack.c.h.b16 %v877
    %v1055 = vunpack.c.l.b16 %v878
    %v1056 = vunpack.c.h.b16 %v878
    %v1057 = vunpack.c.l.b16 %v879
    %v1058 = vunpack.c.h.b16 %v879
    %v1059 = vunpack.c.l.b16 %v880
    %v1060 = vunpack.c.h.b16 %v880
    %v1061 = vunpack.c.l.b16 %v881
    %v1062 = vunpack.c.h.b16 %v881
    %v1063 = vunpack.c.l.b16 %v882
    %v1064 = vunpack.c.h.b16 %v882
    %v1065 = vunpack.c.l.b16 %v883
    %v1066 = vunpack.c.h.b16 %v883
    %v1067 = vunpack.c.l.b16 %v884
    %v1068 = vunpack.c.h.b16 %v884
    %v1069 = vunpack.c.l.b16 %v885
    %v1070 = vunpack.c.h.b16 %v885
    %v1071 = vunpack.c.l.b16 %v886
    %v1072 = vunpack.c.h.b16 %v886
    %v1073 = vunpack.c.l.b16 %v887
    %v1074 = vunpack.c.h.b16 %v887
    %v1075 = vunpack.c.l.b16 %v888
    %v1076 = vunpack.c.h.b16 %v888
    %v1077 = vunpack.c.l.b16 %v889
    %v1078 = vunpack.c.h.b16 %v889
    %v1079 = vunpack.c.l.b16 %v890
    %v1080 = vunpack.c.h.b16 %v890
    %v1081 = vunpack.c.l.b16 %v891
    %v1082 = vunpack.c.h.b16 %v891
    %v1083 = vunpack.c.l.b16 %v892
    %v1084 = vunpack.c.h.b16 %v892
    %v1085 = vunpack.c.l.b16 %v893
    %v1086 = vunpack.c.h.b16 %v893
    %v1087 = vunpack.c.l.b16 %v894
    %v1088 = vunpack.c.h.b16 %v894
    %v1089 = vunpack.c.l.b16 %v895
    %v1090 = vunpack.c.h.b16 %v895
    %v1091 = vunpack.c.l.b16 %v896
    %v1092 = vunpack.c.h.b16 %v896
    %v1093 = vunpack.c.l.b16 %v897
    %v1094 = vunpack.c.h.b16 %v897
    %v1095 = vunpack.c.l.b16 %v898
    %v1096 = vunpack.c.h.b16 %v898
    %v1097 = vunpack.c.l.b16 %v899
    %v1098 = vunpack.c.h.b16 %v899
    %v1099 = vunpack.c.l.b16 %v900
    %v1100 = vunpack.c.h.b16 %v900
    %v1101 = vunpack.c.l.b16 %v901
    %v1102 = vunpack.c.h.b16 %v901
    %v1103 = vunpack.c.l.b16 %v902
    %v1104 = vunpack.c.h.b16 %v902
    %v1105 = vunpack.c.l.b16 %v903
    %v1106 = vunpack.c.h.b16 %v903
    %v1107 = vunpack.c.l.b16 %v904
    %v1108 = vunpack.c.h.b16 %v904
    %v1109 = vunpack.c.l.b16 %v905
    %v1110 = vunpack.c.h.b16 %v905
    %v1111 = vunpack.c.l.b16 %v906
    %v1112 = vunpack.c.h.b16 %v906
    %v1113 = vunpack.c.l.b16 %v907
    %v1114 = vunpack.c.h.b16 %v907
    %v1115 = vunpack.c.l.b16 %v908
    %v1116 = vunpack.c.h.b16 %v908
    %v1117 = vunpack.c.l.b16 %v909
    %v1118 = vunpack.c.h.b16 %v909
    %v1119 = vunpack.c.l.b16 %v910
    %v1120 = vunpack.c.h.b16 %v910
    %v1121 = vunpack.c.l.b16 %v911
    %v1122 = vunpack.c.h.b16 %v911
    %v1123 = vunpack.c.l.b16 %v912
    %v1124 = vunpack.c.h.b16 %v912
    %v1125 = vunpack.c.l.b16 %v913
    %v1126 = vunpack.c.h.b16 %v913
    %v1127 = vunpack.c.l.b16 %v914
    %v1128 = vunpack.c.h.b16 %v914
    %v1129 = vunpack.c.l.b16 %v915
    %v1130 = vunpack.c.h.b16 %v915
    %v1131 = vunpack.c.l.b16 %v916
    %v1132 = vunpack.c.h.b16 %v916
    %v1133 = vunpack.c.l.b16 %v917
    %v1134 = vunpack.c.h.b16 %v917
    %v1135 = vunpack.c.l.b16 %v918
    %v1136 = vunpack.c.h.b16 %v918
    %v1137 = vunpack.c.l.b16 %v919
    %v1138 = vunpack.c.h.b16 %v919
    %v1139 = vunpack.c.l.b16 %v920
    %v1140 = vunpack.c.h.b16 %v920
    %v1141 = vunpack.c.l.b16 %v921
    %v1142 = vunpack.c.h.b16 %v921
    %v1143 = vunpack.c.l.b16 %v922
    %v1144 = vunpack.c.h.b16 %v922
    %v1145 = vunpack.c.l.b16 %v923
    %v1146 = vunpack.c.h.b16 %v923
    %v1147 = vpack.c.b16 %v1023, %v1019
    %v1148 = vpack.c.b16 %v1024, %v1020
    %v1149 = vpack.c.b16 %v1025, %v1021
    %v1150 = vpack.c.b16 %v1026, %v1022
    %v1151 = vpack.c.b16 %v1031, %v1027
    %v1152 = vpack.c.b16 %v1032, %v1028
    %v1153 = vpack.c.b16 %v1033, %v1029
    %v1154 = vpack.c.b16 %v1034, %v1030
    %v1155 = vpack.c.b16 %v1039, %v1035
    %v1156 = vpack.c.b16 %v1040, %v1036
    %v1157 = vpack.c.b16 %v1041, %v1037
    %v1158 = vpack.c.b16 %v1042, %v1038
    %v1159 = vpack.c.b16 %v1047, %v1043
    %v1160 = vpack.c.b16 %v1048, %v1044
    %v1161 = vpack.c.b16 %v1049, %v1045
    %v1162 = vpack.c.b16 %v1050, %v1046
    %v1163 = vpack.c.b16 %v1055, %v1051
    %v1164 = vpack.c.b16 %v1056, %v1052
    %v1165 = vpack.c.b16 %v1057, %v1053
    %v1166 = vpack.c.b16 %v1058, %v1054
    %v1167 = vpack.c.b16 %v1063, %v1059
    %v1168 = vpack.c.b16 %v1064, %v1060
    %v1169 = vpack.c.b16 %v1065, %v1061
    %v1170 = vpack.c.b16 %v1066, %v1062
    %v1171 = vpack.c.b16 %v1071, %v1067
    %v1172 = vpack.c.b16 %v1072, %v1068
    %v1173 = vpack.c.b16 %v1073, %v1069
    %v1174 = vpack.c.b16 %v1074, %v1070
    %v1175 = vpack.c.b16 %v1079, %v1075
    %v1176 = vpack.c.b16 %v1080, %v1076
    %v1177 = vpack.c.b16 %v1081, %v1077
    %v1178 = vpack.c.b16 %v1082, %v1078
    %v1179 = vpack.c.b16 %v1087, %v1083
    %v1180 = vpack.c.b16 %v1088, %v1084
    %v1181 = vpack.c.b16 %v1089, %v1085
    %v1182 = vpack.c.b16 %v1090, %v1086
    %v1183 = vpack.c.b16 %v1095, %v1091
    %v1184 = vpack.c.b16 %v1096, %v1092
    %v1185 = vpack.c.b16 %v1097, %v1093
    %v1186 = vpack.c.b16 %v1098, %v1094
    %v1187 = vpack.c.b16 %v1103, %v1099
    %v1188 = vpack.c.b16 %v1104, %v1100
    %v1189 = vpack.c.b16 %v1105, %v1101
    %v1190 = vpack.c.b16 %v1106, %v1102
    %v1191 = vpack.c.b16 %v1111, %v1107
    %v1192 = vpack.c.b16 %v1112, %v1108
    %v1193 = vpack.c.b16 %v1113, %v1109
    %v1194 = vpack.c.b16 %v1114, %v1110
    %v1195 = vpack.c.b16 %v1119, %v1115
    %v1196 = vpack.c.b16 %v1120, %v1116
    %v1197 = vpack.c.b16 %v1121, %v1117
    %v1198 = vpack.c.b16 %v1122, %v1118
    %v1199 = vpack.c.b16 %v1127, %v1123
    %v1200 = vpack.c.b16 %v1128, %v1124
    %v1201 = vpack.c.b16 %v1129, %v1125
    %v1202 = vpack.c.b16 %v1130, %v1126
    %v1203 = vpack.c.b16 %v1135, %v1131
    %v1204 = vpack.c.b16 %v1136, %v1132
    %v1205 = vpack.c.b16 %v1137, %v1133
    %v1206 = vpack.c.b16 %v1138, %v1134
    %v1207 = vpack.c.b16 %v1143, %v1139
    %v1208 = vpack.c.b16 %v1144, %v1140
    %v1209 = vpack.c.b16 %v1145, %v1141
    %v1210 = vpack.c.b16 %v1146, %v1142
    %1275 = vmatprep.subr.bf16.mxu0 %v1148
    %1276 = vmatpush1.bf16.msra.mxu0 %v1147
    %1277 = vmatprep.subr.bf16.mxu0 %v1152
    %1278 = vmatpush1.bf16.msra.mxu0 %v1151
    %1279 = vmatprep.subr.bf16.mxu0 %v1156
    %1280 = vmatpush1.bf16.msra.mxu0 %v1155
    %1281 = vmatprep.subr.bf16.mxu0 %v1160
    %1282 = vmatpush1.bf16.msra.mxu0 %v1159
    %1283 = vmatprep.subr.bf16.mxu0 %v1164
    %1284 = vmatpush1.bf16.msra.mxu0 %v1163
    %1285 = vmatprep.subr.bf16.mxu0 %v1168
    %1286 = vmatpush1.bf16.msra.mxu0 %v1167
    %1287 = vmatprep.subr.bf16.mxu0 %v1172
    %1288 = vmatpush1.bf16.msra.mxu0 %v1171
    %1289 = vmatprep.subr.bf16.mxu0 %v1176
    %1290 = vmatpush1.bf16.msra.mxu0 %v1175
    %1291 = vmatprep.subr.bf16.mxu0 %v1180
    %1292 = vmatpush1.bf16.msra.mxu0 %v1179
    %1293 = vmatprep.subr.bf16.mxu0 %v1184
    %1294 = vmatpush1.bf16.msra.mxu0 %v1183
    %1295 = vmatprep.subr.bf16.mxu0 %v1188
    %1296 = vmatpush1.bf16.msra.mxu0 %v1187
    %1297 = vmatprep.subr.bf16.mxu0 %v1192
    %1298 = vmatpush1.bf16.msra.mxu0 %v1191
    %1299 = vmatprep.subr.bf16.mxu0 %v1196
    %1300 = vmatpush1.bf16.msra.mxu0 %v1195
    %1301 = vmatprep.subr.bf16.mxu0 %v1200
    %1302 = vmatpush1.bf16.msra.mxu0 %v1199
    %1303 = vmatprep.subr.bf16.mxu0 %v1204
    %1304 = vmatpush1.bf16.msra.mxu0 %v1203
    %1305 = vmatprep.subr.bf16.mxu0 %v1208
    %1306 = vmatpush1.bf16.msra.mxu0 %v1207
    %1307 = vmatprep.mubr.bf16.mxu0 %v954
    %1308 = vmatmul.mubr.bf16.gmra.mrb[0].mxu0 %v953
    %v1309 = vpop.f32.mrb[0].mxu0
    %v1310 = vadd.f32 0.0, %v1309
    %v1311 = vpop.f32.mrb[0].mxu0
    %v1312 = vadd.f32 0.0, %v1311
    %v1313 = vpop.f32.mrb[0].mxu0
    %v1314 = vadd.f32 0.0, %v1313
    %v1315 = vpop.f32.mrb[0].mxu0
    %v1316 = vadd.f32 0.0, %v1315
    %1317 = vdwg.mxu0
    %1318 = vmatprep.subr.bf16.mxu0 %v1150
    %1319 = vmatpush1.bf16.msra.mxu0 %v1149
    %1320 = vmatprep.subr.bf16.mxu0 %v1154
    %1321 = vmatpush1.bf16.msra.mxu0 %v1153
    %1322 = vmatprep.subr.bf16.mxu0 %v1158
    %1323 = vmatpush1.bf16.msra.mxu0 %v1157
    %1324 = vmatprep.subr.bf16.mxu0 %v1162
    %1325 = vmatpush1.bf16.msra.mxu0 %v1161
    %1326 = vmatprep.subr.bf16.mxu0 %v1166
    %1327 = vmatpush1.bf16.msra.mxu0 %v1165
    %1328 = vmatprep.subr.bf16.mxu0 %v1170
    %1329 = vmatpush1.bf16.msra.mxu0 %v1169
    %1330 = vmatprep.subr.bf16.mxu0 %v1174
    %1331 = vmatpush1.bf16.msra.mxu0 %v1173
    %1332 = vmatprep.subr.bf16.mxu0 %v1178
    %1333 = vmatpush1.bf16.msra.mxu0 %v1177
    %1334 = vmatprep.subr.bf16.mxu0 %v1182
    %1335 = vmatpush1.bf16.msra.mxu0 %v1181
    %1336 = vmatprep.subr.bf16.mxu0 %v1186
    %1337 = vmatpush1.bf16.msra.mxu0 %v1185
    %1338 = vmatprep.subr.bf16.mxu0 %v1190
    %1339 = vmatpush1.bf16.msra.mxu0 %v1189
    %1340 = vmatprep.subr.bf16.mxu0 %v1194
    %1341 = vmatpush1.bf16.msra.mxu0 %v1193
    %1342 = vmatprep.subr.bf16.mxu0 %v1198
    %1343 = vmatpush1.bf16.msra.mxu0 %v1197
    %1344 = vmatprep.subr.bf16.mxu0 %v1202
    %1345 = vmatpush1.bf16.msra.mxu0 %v1201
    %1346 = vmatprep.subr.bf16.mxu0 %v1206
    %1347 = vmatpush1.bf16.msra.mxu0 %v1205
    %1348 = vmatprep.subr.bf16.mxu0 %v1210
    %1349 = vmatpush1.bf16.msra.mxu0 %v1209
    %1350 = vmatprep.mubr.bf16.mxu0 %v954
    %1351 = vmatmul.mubr.bf16.gmra.mrb[0].mxu0 %v953
    %v1352 = vpop.f32.mrb[0].mxu0
    %v1353 = vadd.f32 0.0, %v1352
    %v1354 = vpop.f32.mrb[0].mxu0
    %v1355 = vadd.f32 0.0, %v1354
    %v1356 = vpop.f32.mrb[0].mxu0
    %v1357 = vadd.f32 0.0, %v1356
    %v1358 = vpop.f32.mrb[0].mxu0
    %v1359 = vadd.f32 0.0, %v1358
    %1360 = vdwg.mxu0
    %v1361 = vadd.f32 %v938, %v1310
    %v1362 = vadd.f32 %v939, %v1312
    %v1363 = vadd.f32 %v940, %v1353
    %v1364 = vadd.f32 %v941, %v1355
    %v1365 = vadd.f32 %v945, %v1314
    %v1366 = vadd.f32 %v946, %v1316
    %v1367 = vadd.f32 %v947, %v1357
    %v1368 = vadd.f32 %v948, %v1359
    %v1369 = vmul.f32 %v1361, 0.5
    %v1370 = vmul.f32 %v1365, 0.5
    %v1371 = vtanh.pop %v1369
    %v1372 = vtanh.pop %v1370
    %v1373 = vmul.f32 %v1371, 0.5
    %v1374 = vmul.f32 %v1372, 0.5
    %v1375 = vadd.f32 %v1373, 0.5
    %v1376 = vadd.f32 %v1374, 0.5
    %v1377 = vmul.f32 %v1362, 0.5
    %v1378 = vmul.f32 %v1366, 0.5
    %v1379 = vtanh.pop %v1377
    %v1380 = vtanh.pop %v1378
    %v1381 = vmul.f32 %v1379, 0.5
    %v1382 = vmul.f32 %v1380, 0.5
    %v1383 = vadd.f32 %v1381, 0.5
    %v1384 = vadd.f32 %v1382, 0.5
    %v1385 = vtanh.pop %v1363
    %v1386 = vtanh.pop %v1367
    %v1387 = vmul.f32 %v1364, 0.5
    %v1388 = vmul.f32 %v1368, 0.5
    %v1389 = vtanh.pop %v1387
    %v1390 = vtanh.pop %v1388
    %v1391 = vmul.f32 %v1389, 0.5
    %v1392 = vmul.f32 %v1390, 0.5
    %v1393 = vadd.f32 %v1391, 0.5
    %v1394 = vadd.f32 %v1392, 0.5
    %v1395 = vmul.f32 %v1383, 0.0
    %v1396 = vmul.f32 %v1384, 0.0
    %v1397 = vmul.f32 %v1375, %v1385
    %v1398 = vmul.f32 %v1376, %v1386
    %v1399 = vadd.f32 %v1395, %v1397
    %v1400 = vadd.f32 %v1396, %v1398
    %v1401 = vtanh.pop %v1399
    %v1402 = vtanh.pop %v1400
    %v1403 = vmul.f32 %v1393, %v1401
    %v1404 = vmul.f32 %v1394, %v1402
    %s1405 = smul.u32 1, 8
    %s1406 = smul.addr %s1405, 8
    %s1407 = scalar_lea.vmem [#allocation2], %s1406
    %v1408 = vld [vmem:[%s1407] sm:$0xff]
    %v1409 = vld [vmem:[%s1407 + $0x8] sm:$0xff]
    %v1410 = vld [vmem:[%s1407 + $0x10] sm:$0xff]
    %v1411 = vld [vmem:[%s1407 + $0x18] sm:$0xff]
    %s1412 = smul.u32 6, 8
    %s1413 = smul.addr %s1412, 8
    %s1414 = scalar_lea.vmem [#allocation2], %s1413
    %v1415 = vld [vmem:[%s1414 + $0x20] sm:$0xff]
    %v1416 = vld [vmem:[%s1414 + $0x28] sm:$0xff]
    %v1417 = vld [vmem:[%s1414 + $0x30] sm:$0xff]
    %v1418 = vld [vmem:[%s1414 + $0x38] sm:$0xff]
    %v1419 = vmul.f32 %v1403, %v931
    %v1420 = vmul.f32 %v1404, %v932
    %v1421 = vmul.f32 %v1403, %v933
    %v1422 = vmul.f32 %v1404, %v934
    %v1423 = vpack.c.bf16 %v1420, %v1419
    %v1424 = vpack.c.bf16 %v1422, %v1421
    %1425 = vmatprep.subr.bf16.mxu0 %v1148
    %1426 = vmatpush1.bf16.msra.mxu0 %v1147
    %1427 = vmatprep.subr.bf16.mxu0 %v1152
    %1428 = vmatpush1.bf16.msra.mxu0 %v1151
    %1429 = vmatprep.subr.bf16.mxu0 %v1156
    %1430 = vmatpush1.bf16.msra.mxu0 %v1155
    %1431 = vmatprep.subr.bf16.mxu0 %v1160
    %1432 = vmatpush1.bf16.msra.mxu0 %v1159
    %1433 = vmatprep.subr.bf16.mxu0 %v1164
    %1434 = vmatpush1.bf16.msra.mxu0 %v1163
    %1435 = vmatprep.subr.bf16.mxu0 %v1168
    %1436 = vmatpush1.bf16.msra.mxu0 %v1167
    %1437 = vmatprep.subr.bf16.mxu0 %v1172
    %1438 = vmatpush1.bf16.msra.mxu0 %v1171
    %1439 = vmatprep.subr.bf16.mxu0 %v1176
    %1440 = vmatpush1.bf16.msra.mxu0 %v1175
    %1441 = vmatprep.subr.bf16.mxu0 %v1180
    %1442 = vmatpush1.bf16.msra.mxu0 %v1179
    %1443 = vmatprep.subr.bf16.mxu0 %v1184
    %1444 = vmatpush1.bf16.msra.mxu0 %v1183
    %1445 = vmatprep.subr.bf16.mxu0 %v1188
    %1446 = vmatpush1.bf16.msra.mxu0 %v1187
    %1447 = vmatprep.subr.bf16.mxu0 %v1192
    %1448 = vmatpush1.bf16.msra.mxu0 %v1191
    %1449 = vmatprep.subr.bf16.mxu0 %v1196
    %1450 = vmatpush1.bf16.msra.mxu0 %v1195
    %1451 = vmatprep.subr.bf16.mxu0 %v1200
    %1452 = vmatpush1.bf16.msra.mxu0 %v1199
    %1453 = vmatprep.subr.bf16.mxu0 %v1204
    %1454 = vmatpush1.bf16.msra.mxu0 %v1203
    %1455 = vmatprep.subr.bf16.mxu0 %v1208
    %1456 = vmatpush1.bf16.msra.mxu0 %v1207
    %1457 = vmatprep.mubr.bf16.mxu0 %v1424
    %1458 = vmatmul.mubr.bf16.gmra.mrb[0].mxu0 %v1423
    %v1459 = vpop.f32.mrb[0].mxu0
    %v1460 = vadd.f32 0.0, %v1459
    %v1461 = vpop.f32.mrb[0].mxu0
    %v1462 = vadd.f32 0.0, %v1461
    %v1463 = vpop.f32.mrb[0].mxu0
    %v1464 = vadd.f32 0.0, %v1463
    %v1465 = vpop.f32.mrb[0].mxu0
    %v1466 = vadd.f32 0.0, %v1465
    %1467 = vdwg.mxu0
    %1468 = vmatprep.subr.bf16.mxu0 %v1150
    %1469 = vmatpush1.bf16.msra.mxu0 %v1149
    %1470 = vmatprep.subr.bf16.mxu0 %v1154
    %1471 = vmatpush1.bf16.msra.mxu0 %v1153
    %1472 = vmatprep.subr.bf16.mxu0 %v1158
    %1473 = vmatpush1.bf16.msra.mxu0 %v1157
    %1474 = vmatprep.subr.bf16.mxu0 %v1162
    %1475 = vmatpush1.bf16.msra.mxu0 %v1161
    %1476 = vmatprep.subr.bf16.mxu0 %v1166
    %1477 = vmatpush1.bf16.msra.mxu0 %v1165
    %1478 = vmatprep.subr.bf16.mxu0 %v1170
    %1479 = vmatpush1.bf16.msra.mxu0 %v1169
    %1480 = vmatprep.subr.bf16.mxu0 %v1174
    %1481 = vmatpush1.bf16.msra.mxu0 %v1173
    %1482 = vmatprep.subr.bf16.mxu0 %v1178
    %1483 = vmatpush1.bf16.msra.mxu0 %v1177
    %1484 = vmatprep.subr.bf16.mxu0 %v1182
    %1485 = vmatpush1.bf16.msra.mxu0 %v1181
    %1486 = vmatprep.subr.bf16.mxu0 %v1186
    %1487 = vmatpush1.bf16.msra.mxu0 %v1185
    %1488 = vmatprep.subr.bf16.mxu0 %v1190
    %1489 = vmatpush1.bf16.msra.mxu0 %v1189
    %1490 = vmatprep.subr.bf16.mxu0 %v1194
    %1491 = vmatpush1.bf16.msra.mxu0 %v1193
    %1492 = vmatprep.subr.bf16.mxu0 %v1198
    %1493 = vmatpush1.bf16.msra.mxu0 %v1197
    %1494 = vmatprep.subr.bf16.mxu0 %v1202
    %1495 = vmatpush1.bf16.msra.mxu0 %v1201
    %1496 = vmatprep.subr.bf16.mxu0 %v1206
    %1497 = vmatpush1.bf16.msra.mxu0 %v1205
    %1498 = vmatprep.subr.bf16.mxu0 %v1210
    %1499 = vmatpush1.bf16.msra.mxu0 %v1209
    %1500 = vmatprep.mubr.bf16.mxu0 %v1424
    %1501 = vmatmul.mubr.bf16.gmra.mrb[0].mxu0 %v1423
    %v1502 = vpop.f32.mrb[0].mxu0
    %v1503 = vadd.f32 0.0, %v1502
    %v1504 = vpop.f32.mrb[0].mxu0
    %v1505 = vadd.f32 0.0, %v1504
    %v1506 = vpop.f32.mrb[0].mxu0
    %v1507 = vadd.f32 0.0, %v1506
    %v1508 = vpop.f32.mrb[0].mxu0
    %v1509 = vadd.f32 0.0, %v1508
    %1510 = vdwg.mxu0
    %v1511 = vadd.f32 %v1408, %v1460
    %v1512 = vadd.f32 %v1409, %v1462
    %v1513 = vadd.f32 %v1410, %v1503
    %v1514 = vadd.f32 %v1411, %v1505
    %v1515 = vadd.f32 %v1415, %v1464
    %v1516 = vadd.f32 %v1416, %v1466
    %v1517 = vadd.f32 %v1417, %v1507
    %v1518 = vadd.f32 %v1418, %v1509
    %v1519 = vmul.f32 %v1511, 0.5
    %v1520 = vmul.f32 %v1515, 0.5
    %v1521 = vtanh.pop %v1519
    %v1522 = vtanh.pop %v1520
    %v1523 = vmul.f32 %v1521, 0.5
    %v1524 = vmul.f32 %v1522, 0.5
    %v1525 = vadd.f32 %v1523, 0.5
    %v1526 = vadd.f32 %v1524, 0.5
    %v1527 = vmul.f32 %v1512, 0.5
    %v1528 = vmul.f32 %v1516, 0.5
    %v1529 = vtanh.pop %v1527
    %v1530 = vtanh.pop %v1528
    %v1531 = vmul.f32 %v1529, 0.5
    %v1532 = vmul.f32 %v1530, 0.5
    %v1533 = vadd.f32 %v1531, 0.5
    %v1534 = vadd.f32 %v1532, 0.5
    %v1535 = vtanh.pop %v1513
    %v1536 = vtanh.pop %v1517
    %v1537 = vmul.f32 %v1514, 0.5
    %v1538 = vmul.f32 %v1518, 0.5
    %v1539 = vtanh.pop %v1537
    %v1540 = vtanh.pop %v1538
    %v1541 = vmul.f32 %v1539, 0.5
    %v1542 = vmul.f32 %v1540, 0.5
    %v1543 = vadd.f32 %v1541, 0.5
    %v1544 = vadd.f32 %v1542, 0.5
    %v1545 = vmul.f32 %v1533, %v1399
    %v1546 = vmul.f32 %v1534, %v1400
    %v1547 = vmul.f32 %v1525, %v1535
    %v1548 = vmul.f32 %v1526, %v1536
    %v1549 = vadd.f32 %v1545, %v1547
    %v1550 = vadd.f32 %v1546, %v1548
    %v1551 = vtanh.pop %v1549
    %v1552 = vtanh.pop %v1550
    %v1553 = vmul.f32 %v1543, %v1551
    %v1554 = vmul.f32 %v1544, %v1552
    %s1555 = smul.u32 2, 8
    %s1556 = smul.addr %s1555, 8
    %s1557 = scalar_lea.vmem [#allocation2], %s1556
    %v1558 = vld [vmem:[%s1557] sm:$0xff]
    %v1559 = vld [vmem:[%s1557 + $0x8] sm:$0xff]
    %v1560 = vld [vmem:[%s1557 + $0x10] sm:$0xff]
    %v1561 = vld [vmem:[%s1557 + $0x18] sm:$0xff]
    %s1562 = smul.u32 5, 8
    %s1563 = smul.addr %s1562, 8
    %s1564 = scalar_lea.vmem [#allocation2], %s1563
    %v1565 = vld [vmem:[%s1564 + $0x20] sm:$0xff]
    %v1566 = vld [vmem:[%s1564 + $0x28] sm:$0xff]
    %v1567 = vld [vmem:[%s1564 + $0x30] sm:$0xff]
    %v1568 = vld [vmem:[%s1564 + $0x38] sm:$0xff]
    %v1569 = vmul.f32 %v1553, %v931
    %v1570 = vmul.f32 %v1554, %v932
    %v1571 = vmul.f32 %v1553, %v933
    %v1572 = vmul.f32 %v1554, %v934
    %v1573 = vpack.c.bf16 %v1570, %v1569
    %v1574 = vpack.c.bf16 %v1572, %v1571
    %1575 = vmatprep.subr.bf16.mxu0 %v1148
    %1576 = vmatpush1.bf16.msra.mxu0 %v1147
    %1577 = vmatprep.subr.bf16.mxu0 %v1152
    %1578 = vmatpush1.bf16.msra.mxu0 %v1151
    %1579 = vmatprep.subr.bf16.mxu0 %v1156
    %1580 = vmatpush1.bf16.msra.mxu0 %v1155
    %1581 = vmatprep.subr.bf16.mxu0 %v1160
    %1582 = vmatpush1.bf16.msra.mxu0 %v1159
    %1583 = vmatprep.subr.bf16.mxu0 %v1164
    %1584 = vmatpush1.bf16.msra.mxu0 %v1163
    %1585 = vmatprep.subr.bf16.mxu0 %v1168
    %1586 = vmatpush1.bf16.msra.mxu0 %v1167
    %1587 = vmatprep.subr.bf16.mxu0 %v1172
    %1588 = vmatpush1.bf16.msra.mxu0 %v1171
    %1589 = vmatprep.subr.bf16.mxu0 %v1176
    %1590 = vmatpush1.bf16.msra.mxu0 %v1175
    %1591 = vmatprep.subr.bf16.mxu0 %v1180
    %1592 = vmatpush1.bf16.msra.mxu0 %v1179
    %1593 = vmatprep.subr.bf16.mxu0 %v1184
    %1594 = vmatpush1.bf16.msra.mxu0 %v1183
    %1595 = vmatprep.subr.bf16.mxu0 %v1188
    %1596 = vmatpush1.bf16.msra.mxu0 %v1187
    %1597 = vmatprep.subr.bf16.mxu0 %v1192
    %1598 = vmatpush1.bf16.msra.mxu0 %v1191
    %1599 = vmatprep.subr.bf16.mxu0 %v1196
    %1600 = vmatpush1.bf16.msra.mxu0 %v1195
    %1601 = vmatprep.subr.bf16.mxu0 %v1200
    %1602 = vmatpush1.bf16.msra.mxu0 %v1199
    %1603 = vmatprep.subr.bf16.mxu0 %v1204
    %1604 = vmatpush1.bf16.msra.mxu0 %v1203
    %1605 = vmatprep.subr.bf16.mxu0 %v1208
    %1606 = vmatpush1.bf16.msra.mxu0 %v1207
    %1607 = vmatprep.mubr.bf16.mxu0 %v1574
    %1608 = vmatmul.mubr.bf16.gmra.mrb[0].mxu0 %v1573
    %v1609 = vpop.f32.mrb[0].mxu0
    %v1610 = vadd.f32 0.0, %v1609
    %v1611 = vpop.f32.mrb[0].mxu0
    %v1612 = vadd.f32 0.0, %v1611
    %v1613 = vpop.f32.mrb[0].mxu0
    %v1614 = vadd.f32 0.0, %v1613
    %v1615 = vpop.f32.mrb[0].mxu0
    %v1616 = vadd.f32 0.0, %v1615
    %1617 = vdwg.mxu0
    %1618 = vmatprep.subr.bf16.mxu0 %v1150
    %1619 = vmatpush1.bf16.msra.mxu0 %v1149
    %1620 = vmatprep.subr.bf16.mxu0 %v1154
    %1621 = vmatpush1.bf16.msra.mxu0 %v1153
    %1622 = vmatprep.subr.bf16.mxu0 %v1158
    %1623 = vmatpush1.bf16.msra.mxu0 %v1157
    %1624 = vmatprep.subr.bf16.mxu0 %v1162
    %1625 = vmatpush1.bf16.msra.mxu0 %v1161
    %1626 = vmatprep.subr.bf16.mxu0 %v1166
    %1627 = vmatpush1.bf16.msra.mxu0 %v1165
    %1628 = vmatprep.subr.bf16.mxu0 %v1170
    %1629 = vmatpush1.bf16.msra.mxu0 %v1169
    %1630 = vmatprep.subr.bf16.mxu0 %v1174
    %1631 = vmatpush1.bf16.msra.mxu0 %v1173
    %1632 = vmatprep.subr.bf16.mxu0 %v1178
    %1633 = vmatpush1.bf16.msra.mxu0 %v1177
    %1634 = vmatprep.subr.bf16.mxu0 %v1182
    %1635 = vmatpush1.bf16.msra.mxu0 %v1181
    %1636 = vmatprep.subr.bf16.mxu0 %v1186
    %1637 = vmatpush1.bf16.msra.mxu0 %v1185
    %1638 = vmatprep.subr.bf16.mxu0 %v1190
    %1639 = vmatpush1.bf16.msra.mxu0 %v1189
    %1640 = vmatprep.subr.bf16.mxu0 %v1194
    %1641 = vmatpush1.bf16.msra.mxu0 %v1193
    %1642 = vmatprep.subr.bf16.mxu0 %v1198
    %1643 = vmatpush1.bf16.msra.mxu0 %v1197
    %1644 = vmatprep.subr.bf16.mxu0 %v1202
    %1645 = vmatpush1.bf16.msra.mxu0 %v1201
    %1646 = vmatprep.subr.bf16.mxu0 %v1206
    %1647 = vmatpush1.bf16.msra.mxu0 %v1205
    %1648 = vmatprep.subr.bf16.mxu0 %v1210
    %1649 = vmatpush1.bf16.msra.mxu0 %v1209
    %1650 = vmatprep.mubr.bf16.mxu0 %v1574
    %1651 = vmatmul.mubr.bf16.gmra.mrb[0].mxu0 %v1573
    %v1652 = vpop.f32.mrb[0].mxu0
    %v1653 = vadd.f32 0.0, %v1652
    %v1654 = vpop.f32.mrb[0].mxu0
    %v1655 = vadd.f32 0.0, %v1654
    %v1656 = vpop.f32.mrb[0].mxu0
    %v1657 = vadd.f32 0.0, %v1656
    %v1658 = vpop.f32.mrb[0].mxu0
    %v1659 = vadd.f32 0.0, %v1658
    %1660 = vdwg.mxu0
    %v1661 = vadd.f32 %v1558, %v1610
    %v1662 = vadd.f32 %v1559, %v1612
    %v1663 = vadd.f32 %v1560, %v1653
    %v1664 = vadd.f32 %v1561, %v1655
    %v1665 = vadd.f32 %v1565, %v1614
    %v1666 = vadd.f32 %v1566, %v1616
    %v1667 = vadd.f32 %v1567, %v1657
    %v1668 = vadd.f32 %v1568, %v1659
    %v1669 = vmul.f32 %v1661, 0.5
    %v1670 = vmul.f32 %v1665, 0.5
    %v1671 = vtanh.pop %v1669
    %v1672 = vtanh.pop %v1670
    %v1673 = vmul.f32 %v1671, 0.5
    %v1674 = vmul.f32 %v1672, 0.5
    %v1675 = vadd.f32 %v1673, 0.5
    %v1676 = vadd.f32 %v1674, 0.5
    %v1677 = vmul.f32 %v1662, 0.5
    %v1678 = vmul.f32 %v1666, 0.5
    %v1679 = vtanh.pop %v1677
    %v1680 = vtanh.pop %v1678
    %v1681 = vmul.f32 %v1679, 0.5
    %v1682 = vmul.f32 %v1680, 0.5
    %v1683 = vadd.f32 %v1681, 0.5
    %v1684 = vadd.f32 %v1682, 0.5
    %v1685 = vtanh.pop %v1663
    %v1686 = vtanh.pop %v1667
    %v1687 = vmul.f32 %v1664, 0.5
    %v1688 = vmul.f32 %v1668, 0.5
    %v1689 = vtanh.pop %v1687
    %v1690 = vtanh.pop %v1688
    %v1691 = vmul.f32 %v1689, 0.5
    %v1692 = vmul.f32 %v1690, 0.5
    %v1693 = vadd.f32 %v1691, 0.5
    %v1694 = vadd.f32 %v1692, 0.5
    %v1695 = vmul.f32 %v1683, %v1549
    %v1696 = vmul.f32 %v1684, %v1550
    %v1697 = vmul.f32 %v1675, %v1685
    %v1698 = vmul.f32 %v1676, %v1686
    %v1699 = vadd.f32 %v1695, %v1697
    %v1700 = vadd.f32 %v1696, %v1698
    %v1701 = vtanh.pop %v1699
    %v1702 = vtanh.pop %v1700
    %v1703 = vmul.f32 %v1693, %v1701
    %v1704 = vmul.f32 %v1694, %v1702
    %s1705 = smul.u32 3, 8
    %s1706 = smul.addr %s1705, 8
    %s1707 = scalar_lea.vmem [#allocation2], %s1706
    %v1708 = vld [vmem:[%s1707] sm:$0xff]
    %v1709 = vld [vmem:[%s1707 + $0x8] sm:$0xff]
    %v1710 = vld [vmem:[%s1707 + $0x10] sm:$0xff]
    %v1711 = vld [vmem:[%s1707 + $0x18] sm:$0xff]
    %s1712 = smul.u32 4, 8
    %s1713 = smul.addr %s1712, 8
    %s1714 = scalar_lea.vmem [#allocation2], %s1713
    %v1715 = vld [vmem:[%s1714 + $0x20] sm:$0xff]
    %v1716 = vld [vmem:[%s1714 + $0x28] sm:$0xff]
    %v1717 = vld [vmem:[%s1714 + $0x30] sm:$0xff]
    %v1718 = vld [vmem:[%s1714 + $0x38] sm:$0xff]
    %v1719 = vmul.f32 %v1703, %v931
    %v1720 = vmul.f32 %v1704, %v932
    %v1721 = vmul.f32 %v1703, %v933
    %v1722 = vmul.f32 %v1704, %v934
    %v1723 = vpack.c.bf16 %v1720, %v1719
    %v1724 = vpack.c.bf16 %v1722, %v1721
    %1725 = vmatprep.subr.bf16.mxu0 %v1148
    %1726 = vmatpush1.bf16.msra.mxu0 %v1147
    %1727 = vmatprep.subr.bf16.mxu0 %v1152
    %1728 = vmatpush1.bf16.msra.mxu0 %v1151
    %1729 = vmatprep.subr.bf16.mxu0 %v1156
    %1730 = vmatpush1.bf16.msra.mxu0 %v1155
    %1731 = vmatprep.subr.bf16.mxu0 %v1160
    %1732 = vmatpush1.bf16.msra.mxu0 %v1159
    %1733 = vmatprep.subr.bf16.mxu0 %v1164
    %1734 = vmatpush1.bf16.msra.mxu0 %v1163
    %1735 = vmatprep.subr.bf16.mxu0 %v1168
    %1736 = vmatpush1.bf16.msra.mxu0 %v1167
    %1737 = vmatprep.subr.bf16.mxu0 %v1172
    %1738 = vmatpush1.bf16.msra.mxu0 %v1171
    %1739 = vmatprep.subr.bf16.mxu0 %v1176
    %1740 = vmatpush1.bf16.msra.mxu0 %v1175
    %1741 = vmatprep.subr.bf16.mxu0 %v1180
    %1742 = vmatpush1.bf16.msra.mxu0 %v1179
    %1743 = vmatprep.subr.bf16.mxu0 %v1184
    %1744 = vmatpush1.bf16.msra.mxu0 %v1183
    %1745 = vmatprep.subr.bf16.mxu0 %v1188
    %1746 = vmatpush1.bf16.msra.mxu0 %v1187
    %1747 = vmatprep.subr.bf16.mxu0 %v1192
    %1748 = vmatpush1.bf16.msra.mxu0 %v1191
    %1749 = vmatprep.subr.bf16.mxu0 %v1196
    %1750 = vmatpush1.bf16.msra.mxu0 %v1195
    %1751 = vmatprep.subr.bf16.mxu0 %v1200
    %1752 = vmatpush1.bf16.msra.mxu0 %v1199
    %1753 = vmatprep.subr.bf16.mxu0 %v1204
    %1754 = vmatpush1.bf16.msra.mxu0 %v1203
    %1755 = vmatprep.subr.bf16.mxu0 %v1208
    %1756 = vmatpush1.bf16.msra.mxu0 %v1207
    %1757 = vmatprep.mubr.bf16.mxu0 %v1724
    %1758 = vmatmul.mubr.bf16.gmra.mrb[0].mxu0 %v1723
    %v1759 = vpop.f32.mrb[0].mxu0
    %v1760 = vadd.f32 0.0, %v1759
    %v1761 = vpop.f32.mrb[0].mxu0
    %v1762 = vadd.f32 0.0, %v1761
    %v1763 = vpop.f32.mrb[0].mxu0
    %v1764 = vadd.f32 0.0, %v1763
    %v1765 = vpop.f32.mrb[0].mxu0
    %v1766 = vadd.f32 0.0, %v1765
    %1767 = vdwg.mxu0
    %1768 = vmatprep.subr.bf16.mxu0 %v1150
    %1769 = vmatpush1.bf16.msra.mxu0 %v1149
    %1770 = vmatprep.subr.bf16.mxu0 %v1154
    %1771 = vmatpush1.bf16.msra.mxu0 %v1153
    %1772 = vmatprep.subr.bf16.mxu0 %v1158
    %1773 = vmatpush1.bf16.msra.mxu0 %v1157
    %1774 = vmatprep.subr.bf16.mxu0 %v1162
    %1775 = vmatpush1.bf16.msra.mxu0 %v1161
    %1776 = vmatprep.subr.bf16.mxu0 %v1166
    %1777 = vmatpush1.bf16.msra.mxu0 %v1165
    %1778 = vmatprep.subr.bf16.mxu0 %v1170
    %1779 = vmatpush1.bf16.msra.mxu0 %v1169
    %1780 = vmatprep.subr.bf16.mxu0 %v1174
    %1781 = vmatpush1.bf16.msra.mxu0 %v1173
    %1782 = vmatprep.subr.bf16.mxu0 %v1178
    %1783 = vmatpush1.bf16.msra.mxu0 %v1177
    %1784 = vmatprep.subr.bf16.mxu0 %v1182
    %1785 = vmatpush1.bf16.msra.mxu0 %v1181
    %1786 = vmatprep.subr.bf16.mxu0 %v1186
    %1787 = vmatpush1.bf16.msra.mxu0 %v1185
    %1788 = vmatprep.subr.bf16.mxu0 %v1190
    %1789 = vmatpush1.bf16.msra.mxu0 %v1189
    %1790 = vmatprep.subr.bf16.mxu0 %v1194
    %1791 = vmatpush1.bf16.msra.mxu0 %v1193
    %1792 = vmatprep.subr.bf16.mxu0 %v1198
    %1793 = vmatpush1.bf16.msra.mxu0 %v1197
    %1794 = vmatprep.subr.bf16.mxu0 %v1202
    %1795 = vmatpush1.bf16.msra.mxu0 %v1201
    %1796 = vmatprep.subr.bf16.mxu0 %v1206
    %1797 = vmatpush1.bf16.msra.mxu0 %v1205
    %1798 = vmatprep.subr.bf16.mxu0 %v1210
    %1799 = vmatpush1.bf16.msra.mxu0 %v1209
    %1800 = vmatprep.mubr.bf16.mxu0 %v1724
    %1801 = vmatmul.mubr.bf16.gmra.mrb[0].mxu0 %v1723
    %v1802 = vpop.f32.mrb[0].mxu0
    %v1803 = vadd.f32 0.0, %v1802
    %v1804 = vpop.f32.mrb[0].mxu0
    %v1805 = vadd.f32 0.0, %v1804
    %v1806 = vpop.f32.mrb[0].mxu0
    %v1807 = vadd.f32 0.0, %v1806
    %v1808 = vpop.f32.mrb[0].mxu0
    %v1809 = vadd.f32 0.0, %v1808
    %1810 = vdwg.mxu0
    %v1811 = vadd.f32 %v1708, %v1760
    %v1812 = vadd.f32 %v1709, %v1762
    %v1813 = vadd.f32 %v1710, %v1803
    %v1814 = vadd.f32 %v1711, %v1805
    %v1815 = vadd.f32 %v1715, %v1764
    %v1816 = vadd.f32 %v1716, %v1766
    %v1817 = vadd.f32 %v1717, %v1807
    %v1818 = vadd.f32 %v1718, %v1809
    %v1819 = vmul.f32 %v1811, 0.5
    %v1820 = vmul.f32 %v1815, 0.5
    %v1821 = vtanh.pop %v1819
    %v1822 = vtanh.pop %v1820
    %v1823 = vmul.f32 %v1821, 0.5
    %v1824 = vmul.f32 %v1822, 0.5
    %v1825 = vadd.f32 %v1823, 0.5
    %v1826 = vadd.f32 %v1824, 0.5
    %v1827 = vmul.f32 %v1812, 0.5
    %v1828 = vmul.f32 %v1816, 0.5
    %v1829 = vtanh.pop %v1827
    %v1830 = vtanh.pop %v1828
    %v1831 = vmul.f32 %v1829, 0.5
    %v1832 = vmul.f32 %v1830, 0.5
    %v1833 = vadd.f32 %v1831, 0.5
    %v1834 = vadd.f32 %v1832, 0.5
    %v1835 = vtanh.pop %v1813
    %v1836 = vtanh.pop %v1817
    %v1837 = vmul.f32 %v1814, 0.5
    %v1838 = vmul.f32 %v1818, 0.5
    %v1839 = vtanh.pop %v1837
    %v1840 = vtanh.pop %v1838
    %v1841 = vmul.f32 %v1839, 0.5
    %v1842 = vmul.f32 %v1840, 0.5
    %v1843 = vadd.f32 %v1841, 0.5
    %v1844 = vadd.f32 %v1842, 0.5
    %v1845 = vmul.f32 %v1833, %v1699
    %v1846 = vmul.f32 %v1834, %v1700
    %v1847 = vmul.f32 %v1825, %v1835
    %v1848 = vmul.f32 %v1826, %v1836
    %v1849 = vadd.f32 %v1845, %v1847
    %v1850 = vadd.f32 %v1846, %v1848
    %v1851 = vtanh.pop %v1849
    %v1852 = vtanh.pop %v1850
    %v1853 = vmul.f32 %v1843, %v1851
    %v1854 = vmul.f32 %v1844, %v1852
    %v1855 = vld [vmem:[%s1714] sm:$0xff]
    %v1856 = vld [vmem:[%s1714 + $0x8] sm:$0xff]
    %v1857 = vld [vmem:[%s1714 + $0x10] sm:$0xff]
    %v1858 = vld [vmem:[%s1714 + $0x18] sm:$0xff]
    %v1859 = vld [vmem:[%s1707 + $0x20] sm:$0xff]
    %v1860 = vld [vmem:[%s1707 + $0x28] sm:$0xff]
    %v1861 = vld [vmem:[%s1707 + $0x30] sm:$0xff]
    %v1862 = vld [vmem:[%s1707 + $0x38] sm:$0xff]
    %v1863 = vmul.f32 %v1853, %v931
    %v1864 = vmul.f32 %v1854, %v932
    %v1865 = vmul.f32 %v1853, %v933
    %v1866 = vmul.f32 %v1854, %v934
    %v1867 = vpack.c.bf16 %v1864, %v1863
    %v1868 = vpack.c.bf16 %v1866, %v1865
    %1869 = vmatprep.subr.bf16.mxu0 %v1148
    %1870 = vmatpush1.bf16.msra.mxu0 %v1147
    %1871 = vmatprep.subr.bf16.mxu0 %v1152
    %1872 = vmatpush1.bf16.msra.mxu0 %v1151
    %1873 = vmatprep.subr.bf16.mxu0 %v1156
    %1874 = vmatpush1.bf16.msra.mxu0 %v1155
    %1875 = vmatprep.subr.bf16.mxu0 %v1160
    %1876 = vmatpush1.bf16.msra.mxu0 %v1159
    %1877 = vmatprep.subr.bf16.mxu0 %v1164
    %1878 = vmatpush1.bf16.msra.mxu0 %v1163
    %1879 = vmatprep.subr.bf16.mxu0 %v1168
    %1880 = vmatpush1.bf16.msra.mxu0 %v1167
    %1881 = vmatprep.subr.bf16.mxu0 %v1172
    %1882 = vmatpush1.bf16.msra.mxu0 %v1171
    %1883 = vmatprep.subr.bf16.mxu0 %v1176
    %1884 = vmatpush1.bf16.msra.mxu0 %v1175
    %1885 = vmatprep.subr.bf16.mxu0 %v1180
    %1886 = vmatpush1.bf16.msra.mxu0 %v1179
    %1887 = vmatprep.subr.bf16.mxu0 %v1184
    %1888 = vmatpush1.bf16.msra.mxu0 %v1183
    %1889 = vmatprep.subr.bf16.mxu0 %v1188
    %1890 = vmatpush1.bf16.msra.mxu0 %v1187
    %1891 = vmatprep.subr.bf16.mxu0 %v1192
    %1892 = vmatpush1.bf16.msra.mxu0 %v1191
    %1893 = vmatprep.subr.bf16.mxu0 %v1196
    %1894 = vmatpush1.bf16.msra.mxu0 %v1195
    %1895 = vmatprep.subr.bf16.mxu0 %v1200
    %1896 = vmatpush1.bf16.msra.mxu0 %v1199
    %1897 = vmatprep.subr.bf16.mxu0 %v1204
    %1898 = vmatpush1.bf16.msra.mxu0 %v1203
    %1899 = vmatprep.subr.bf16.mxu0 %v1208
    %1900 = vmatpush1.bf16.msra.mxu0 %v1207
    %1901 = vmatprep.mubr.bf16.mxu0 %v1868
    %1902 = vmatmul.mubr.bf16.gmra.mrb[0].mxu0 %v1867
    %v1903 = vpop.f32.mrb[0].mxu0
    %v1904 = vadd.f32 0.0, %v1903
    %v1905 = vpop.f32.mrb[0].mxu0
    %v1906 = vadd.f32 0.0, %v1905
    %v1907 = vpop.f32.mrb[0].mxu0
    %v1908 = vadd.f32 0.0, %v1907
    %v1909 = vpop.f32.mrb[0].mxu0
    %v1910 = vadd.f32 0.0, %v1909
    %1911 = vdwg.mxu0
    %1912 = vmatprep.subr.bf16.mxu0 %v1150
    %1913 = vmatpush1.bf16.msra.mxu0 %v1149
    %1914 = vmatprep.subr.bf16.mxu0 %v1154
    %1915 = vmatpush1.bf16.msra.mxu0 %v1153
    %1916 = vmatprep.subr.bf16.mxu0 %v1158
    %1917 = vmatpush1.bf16.msra.mxu0 %v1157
    %1918 = vmatprep.subr.bf16.mxu0 %v1162
    %1919 = vmatpush1.bf16.msra.mxu0 %v1161
    %1920 = vmatprep.subr.bf16.mxu0 %v1166
    %1921 = vmatpush1.bf16.msra.mxu0 %v1165
    %1922 = vmatprep.subr.bf16.mxu0 %v1170
    %1923 = vmatpush1.bf16.msra.mxu0 %v1169
    %1924 = vmatprep.subr.bf16.mxu0 %v1174
    %1925 = vmatpush1.bf16.msra.mxu0 %v1173
    %1926 = vmatprep.subr.bf16.mxu0 %v1178
    %1927 = vmatpush1.bf16.msra.mxu0 %v1177
    %1928 = vmatprep.subr.bf16.mxu0 %v1182
    %1929 = vmatpush1.bf16.msra.mxu0 %v1181
    %1930 = vmatprep.subr.bf16.mxu0 %v1186
    %1931 = vmatpush1.bf16.msra.mxu0 %v1185
    %1932 = vmatprep.subr.bf16.mxu0 %v1190
    %1933 = vmatpush1.bf16.msra.mxu0 %v1189
    %1934 = vmatprep.subr.bf16.mxu0 %v1194
    %1935 = vmatpush1.bf16.msra.mxu0 %v1193
    %1936 = vmatprep.subr.bf16.mxu0 %v1198
    %1937 = vmatpush1.bf16.msra.mxu0 %v1197
    %1938 = vmatprep.subr.bf16.mxu0 %v1202
    %1939 = vmatpush1.bf16.msra.mxu0 %v1201
    %1940 = vmatprep.subr.bf16.mxu0 %v1206
    %1941 = vmatpush1.bf16.msra.mxu0 %v1205
    %1942 = vmatprep.subr.bf16.mxu0 %v1210
    %1943 = vmatpush1.bf16.msra.mxu0 %v1209
    %1944 = vmatprep.mubr.bf16.mxu0 %v1868
    %1945 = vmatmul.mubr.bf16.gmra.mrb[0].mxu0 %v1867
    %v1946 = vpop.f32.mrb[0].mxu0
    %v1947 = vadd.f32 0.0, %v1946
    %v1948 = vpop.f32.mrb[0].mxu0
    %v1949 = vadd.f32 0.0, %v1948
    %v1950 = vpop.f32.mrb[0].mxu0
    %v1951 = vadd.f32 0.0, %v1950
    %v1952 = vpop.f32.mrb[0].mxu0
    %v1953 = vadd.f32 0.0, %v1952
    %1954 = vdwg.mxu0
    %v1955 = vadd.f32 %v1855, %v1904
    %v1956 = vadd.f32 %v1856, %v1906
    %v1957 = vadd.f32 %v1857, %v1947
    %v1958 = vadd.f32 %v1858, %v1949
    %v1959 = vadd.f32 %v1859, %v1908
    %v1960 = vadd.f32 %v1860, %v1910
    %v1961 = vadd.f32 %v1861, %v1951
    %v1962 = vadd.f32 %v1862, %v1953
    %v1963 = vmul.f32 %v1955, 0.5
    %v1964 = vmul.f32 %v1959, 0.5
    %v1965 = vtanh.pop %v1963
    %v1966 = vtanh.pop %v1964
    %v1967 = vmul.f32 %v1965, 0.5
    %v1968 = vmul.f32 %v1966, 0.5
    %v1969 = vadd.f32 %v1967, 0.5
    %v1970 = vadd.f32 %v1968, 0.5
    %v1971 = vmul.f32 %v1956, 0.5
    %v1972 = vmul.f32 %v1960, 0.5
    %v1973 = vtanh.pop %v1971
    %v1974 = vtanh.pop %v1972
    %v1975 = vmul.f32 %v1973, 0.5
    %v1976 = vmul.f32 %v1974, 0.5
    %v1977 = vadd.f32 %v1975, 0.5
    %v1978 = vadd.f32 %v1976, 0.5
    %v1979 = vtanh.pop %v1957
    %v1980 = vtanh.pop %v1961
    %v1981 = vmul.f32 %v1958, 0.5
    %v1982 = vmul.f32 %v1962, 0.5
    %v1983 = vtanh.pop %v1981
    %v1984 = vtanh.pop %v1982
    %v1985 = vmul.f32 %v1983, 0.5
    %v1986 = vmul.f32 %v1984, 0.5
    %v1987 = vadd.f32 %v1985, 0.5
    %v1988 = vadd.f32 %v1986, 0.5
    %v1989 = vmul.f32 %v1977, %v1849
    %v1990 = vmul.f32 %v1978, %v1850
    %v1991 = vmul.f32 %v1969, %v1979
    %v1992 = vmul.f32 %v1970, %v1980
    %v1993 = vadd.f32 %v1989, %v1991
    %v1994 = vadd.f32 %v1990, %v1992
    %v1995 = vtanh.pop %v1993
    %v1996 = vtanh.pop %v1994
    %v1997 = vmul.f32 %v1987, %v1995
    %v1998 = vmul.f32 %v1988, %v1996
    %v1999 = vld [vmem:[%s1564] sm:$0xff]
    %v2000 = vld [vmem:[%s1564 + $0x8] sm:$0xff]
    %v2001 = vld [vmem:[%s1564 + $0x10] sm:$0xff]
    %v2002 = vld [vmem:[%s1564 + $0x18] sm:$0xff]
    %v2003 = vld [vmem:[%s1557 + $0x20] sm:$0xff]
    %v2004 = vld [vmem:[%s1557 + $0x28] sm:$0xff]
    %v2005 = vld [vmem:[%s1557 + $0x30] sm:$0xff]
    %v2006 = vld [vmem:[%s1557 + $0x38] sm:$0xff]
    %v2007 = vmul.f32 %v1997, %v931
    %v2008 = vmul.f32 %v1998, %v932
    %v2009 = vmul.f32 %v1997, %v933
    %v2010 = vmul.f32 %v1998, %v934
    %v2011 = vpack.c.bf16 %v2008, %v2007
    %v2012 = vpack.c.bf16 %v2010, %v2009
    %2013 = vmatprep.subr.bf16.mxu0 %v1148
    %2014 = vmatpush1.bf16.msra.mxu0 %v1147
    %2015 = vmatprep.subr.bf16.mxu0 %v1152
    %2016 = vmatpush1.bf16.msra.mxu0 %v1151
    %2017 = vmatprep.subr.bf16.mxu0 %v1156
    %2018 = vmatpush1.bf16.msra.mxu0 %v1155
    %2019 = vmatprep.subr.bf16.mxu0 %v1160
    %2020 = vmatpush1.bf16.msra.mxu0 %v1159
    %2021 = vmatprep.subr.bf16.mxu0 %v1164
    %2022 = vmatpush1.bf16.msra.mxu0 %v1163
    %2023 = vmatprep.subr.bf16.mxu0 %v1168
    %2024 = vmatpush1.bf16.msra.mxu0 %v1167
    %2025 = vmatprep.subr.bf16.mxu0 %v1172
    %2026 = vmatpush1.bf16.msra.mxu0 %v1171
    %2027 = vmatprep.subr.bf16.mxu0 %v1176
    %2028 = vmatpush1.bf16.msra.mxu0 %v1175
    %2029 = vmatprep.subr.bf16.mxu0 %v1180
    %2030 = vmatpush1.bf16.msra.mxu0 %v1179
    %2031 = vmatprep.subr.bf16.mxu0 %v1184
    %2032 = vmatpush1.bf16.msra.mxu0 %v1183
    %2033 = vmatprep.subr.bf16.mxu0 %v1188
    %2034 = vmatpush1.bf16.msra.mxu0 %v1187
    %2035 = vmatprep.subr.bf16.mxu0 %v1192
    %2036 = vmatpush1.bf16.msra.mxu0 %v1191
    %2037 = vmatprep.subr.bf16.mxu0 %v1196
    %2038 = vmatpush1.bf16.msra.mxu0 %v1195
    %2039 = vmatprep.subr.bf16.mxu0 %v1200
    %2040 = vmatpush1.bf16.msra.mxu0 %v1199
    %2041 = vmatprep.subr.bf16.mxu0 %v1204
    %2042 = vmatpush1.bf16.msra.mxu0 %v1203
    %2043 = vmatprep.subr.bf16.mxu0 %v1208
    %2044 = vmatpush1.bf16.msra.mxu0 %v1207
    %2045 = vmatprep.mubr.bf16.mxu0 %v2012
    %2046 = vmatmul.mubr.bf16.gmra.mrb[0].mxu0 %v2011
    %v2047 = vpop.f32.mrb[0].mxu0
    %v2048 = vadd.f32 0.0, %v2047
    %v2049 = vpop.f32.mrb[0].mxu0
    %v2050 = vadd.f32 0.0, %v2049
    %v2051 = vpop.f32.mrb[0].mxu0
    %v2052 = vadd.f32 0.0, %v2051
    %v2053 = vpop.f32.mrb[0].mxu0
    %v2054 = vadd.f32 0.0, %v2053
    %2055 = vdwg.mxu0
    %2056 = vmatprep.subr.bf16.mxu0 %v1150
    %2057 = vmatpush1.bf16.msra.mxu0 %v1149
    %2058 = vmatprep.subr.bf16.mxu0 %v1154
    %2059 = vmatpush1.bf16.msra.mxu0 %v1153
    %2060 = vmatprep.subr.bf16.mxu0 %v1158
    %2061 = vmatpush1.bf16.msra.mxu0 %v1157
    %2062 = vmatprep.subr.bf16.mxu0 %v1162
    %2063 = vmatpush1.bf16.msra.mxu0 %v1161
    %2064 = vmatprep.subr.bf16.mxu0 %v1166
    %2065 = vmatpush1.bf16.msra.mxu0 %v1165
    %2066 = vmatprep.subr.bf16.mxu0 %v1170
    %2067 = vmatpush1.bf16.msra.mxu0 %v1169
    %2068 = vmatprep.subr.bf16.mxu0 %v1174
    %2069 = vmatpush1.bf16.msra.mxu0 %v1173
    %2070 = vmatprep.subr.bf16.mxu0 %v1178
    %2071 = vmatpush1.bf16.msra.mxu0 %v1177
    %2072 = vmatprep.subr.bf16.mxu0 %v1182
    %2073 = vmatpush1.bf16.msra.mxu0 %v1181
    %2074 = vmatprep.subr.bf16.mxu0 %v1186
    %2075 = vmatpush1.bf16.msra.mxu0 %v1185
    %2076 = vmatprep.subr.bf16.mxu0 %v1190
    %2077 = vmatpush1.bf16.msra.mxu0 %v1189
    %2078 = vmatprep.subr.bf16.mxu0 %v1194
    %2079 = vmatpush1.bf16.msra.mxu0 %v1193
    %2080 = vmatprep.subr.bf16.mxu0 %v1198
    %2081 = vmatpush1.bf16.msra.mxu0 %v1197
    %2082 = vmatprep.subr.bf16.mxu0 %v1202
    %2083 = vmatpush1.bf16.msra.mxu0 %v1201
    %2084 = vmatprep.subr.bf16.mxu0 %v1206
    %2085 = vmatpush1.bf16.msra.mxu0 %v1205
    %2086 = vmatprep.subr.bf16.mxu0 %v1210
    %2087 = vmatpush1.bf16.msra.mxu0 %v1209
    %2088 = vmatprep.mubr.bf16.mxu0 %v2012
    %2089 = vmatmul.mubr.bf16.gmra.mrb[0].mxu0 %v2011
    %v2090 = vpop.f32.mrb[0].mxu0
    %v2091 = vadd.f32 0.0, %v2090
    %v2092 = vpop.f32.mrb[0].mxu0
    %v2093 = vadd.f32 0.0, %v2092
    %v2094 = vpop.f32.mrb[0].mxu0
    %v2095 = vadd.f32 0.0, %v2094
    %v2096 = vpop.f32.mrb[0].mxu0
    %v2097 = vadd.f32 0.0, %v2096
    %2098 = vdwg.mxu0
    %v2099 = vadd.f32 %v1999, %v2048
    %v2100 = vadd.f32 %v2000, %v2050
    %v2101 = vadd.f32 %v2001, %v2091
    %v2102 = vadd.f32 %v2002, %v2093
    %v2103 = vadd.f32 %v2003, %v2052
    %v2104 = vadd.f32 %v2004, %v2054
    %v2105 = vadd.f32 %v2005, %v2095
    %v2106 = vadd.f32 %v2006, %v2097
    %v2107 = vmul.f32 %v2099, 0.5
    %v2108 = vmul.f32 %v2103, 0.5
    %v2109 = vtanh.pop %v2107
    %v2110 = vtanh.pop %v2108
    %v2111 = vmul.f32 %v2109, 0.5
    %v2112 = vmul.f32 %v2110, 0.5
    %v2113 = vadd.f32 %v2111, 0.5
    %v2114 = vadd.f32 %v2112, 0.5
    %v2115 = vmul.f32 %v2100, 0.5
    %v2116 = vmul.f32 %v2104, 0.5
    %v2117 = vtanh.pop %v2115
    %v2118 = vtanh.pop %v2116
    %v2119 = vmul.f32 %v2117, 0.5
    %v2120 = vmul.f32 %v2118, 0.5
    %v2121 = vadd.f32 %v2119, 0.5
    %v2122 = vadd.f32 %v2120, 0.5
    %v2123 = vtanh.pop %v2101
    %v2124 = vtanh.pop %v2105
    %v2125 = vmul.f32 %v2102, 0.5
    %v2126 = vmul.f32 %v2106, 0.5
    %v2127 = vtanh.pop %v2125
    %v2128 = vtanh.pop %v2126
    %v2129 = vmul.f32 %v2127, 0.5
    %v2130 = vmul.f32 %v2128, 0.5
    %v2131 = vadd.f32 %v2129, 0.5
    %v2132 = vadd.f32 %v2130, 0.5
    %v2133 = vmul.f32 %v2121, %v1993
    %v2134 = vmul.f32 %v2122, %v1994
    %v2135 = vmul.f32 %v2113, %v2123
    %v2136 = vmul.f32 %v2114, %v2124
    %v2137 = vadd.f32 %v2133, %v2135
    %v2138 = vadd.f32 %v2134, %v2136
    %v2139 = vtanh.pop %v2137
    %v2140 = vtanh.pop %v2138
    %v2141 = vmul.f32 %v2131, %v2139
    %v2142 = vmul.f32 %v2132, %v2140
    %v2143 = vld [vmem:[%s1414] sm:$0xff]
    %v2144 = vld [vmem:[%s1414 + $0x8] sm:$0xff]
    %v2145 = vld [vmem:[%s1414 + $0x10] sm:$0xff]
    %v2146 = vld [vmem:[%s1414 + $0x18] sm:$0xff]
    %v2147 = vld [vmem:[%s1407 + $0x20] sm:$0xff]
    %v2148 = vld [vmem:[%s1407 + $0x28] sm:$0xff]
    %v2149 = vld [vmem:[%s1407 + $0x30] sm:$0xff]
    %v2150 = vld [vmem:[%s1407 + $0x38] sm:$0xff]
    %v2151 = vmul.f32 %v2141, %v931
    %v2152 = vmul.f32 %v2142, %v932
    %v2153 = vmul.f32 %v2141, %v933
    %v2154 = vmul.f32 %v2142, %v934
    %v2155 = vpack.c.bf16 %v2152, %v2151
    %v2156 = vpack.c.bf16 %v2154, %v2153
    %2157 = vmatprep.subr.bf16.mxu0 %v1148
    %2158 = vmatpush1.bf16.msra.mxu0 %v1147
    %2159 = vmatprep.subr.bf16.mxu0 %v1152
    %2160 = vmatpush1.bf16.msra.mxu0 %v1151
    %2161 = vmatprep.subr.bf16.mxu0 %v1156
    %2162 = vmatpush1.bf16.msra.mxu0 %v1155
    %2163 = vmatprep.subr.bf16.mxu0 %v1160
    %2164 = vmatpush1.bf16.msra.mxu0 %v1159
    %2165 = vmatprep.subr.bf16.mxu0 %v1164
    %2166 = vmatpush1.bf16.msra.mxu0 %v1163
    %2167 = vmatprep.subr.bf16.mxu0 %v1168
    %2168 = vmatpush1.bf16.msra.mxu0 %v1167
    %2169 = vmatprep.subr.bf16.mxu0 %v1172
    %2170 = vmatpush1.bf16.msra.mxu0 %v1171
    %2171 = vmatprep.subr.bf16.mxu0 %v1176
    %2172 = vmatpush1.bf16.msra.mxu0 %v1175
    %2173 = vmatprep.subr.bf16.mxu0 %v1180
    %2174 = vmatpush1.bf16.msra.mxu0 %v1179
    %2175 = vmatprep.subr.bf16.mxu0 %v1184
    %2176 = vmatpush1.bf16.msra.mxu0 %v1183
    %2177 = vmatprep.subr.bf16.mxu0 %v1188
    %2178 = vmatpush1.bf16.msra.mxu0 %v1187
    %2179 = vmatprep.subr.bf16.mxu0 %v1192
    %2180 = vmatpush1.bf16.msra.mxu0 %v1191
    %2181 = vmatprep.subr.bf16.mxu0 %v1196
    %2182 = vmatpush1.bf16.msra.mxu0 %v1195
    %2183 = vmatprep.subr.bf16.mxu0 %v1200
    %2184 = vmatpush1.bf16.msra.mxu0 %v1199
    %2185 = vmatprep.subr.bf16.mxu0 %v1204
    %2186 = vmatpush1.bf16.msra.mxu0 %v1203
    %2187 = vmatprep.subr.bf16.mxu0 %v1208
    %2188 = vmatpush1.bf16.msra.mxu0 %v1207
    %2189 = vmatprep.mubr.bf16.mxu0 %v2156
    %2190 = vmatmul.mubr.bf16.gmra.mrb[0].mxu0 %v2155
    %v2191 = vpop.f32.mrb[0].mxu0
    %v2192 = vadd.f32 0.0, %v2191
    %v2193 = vpop.f32.mrb[0].mxu0
    %v2194 = vadd.f32 0.0, %v2193
    %v2195 = vpop.f32.mrb[0].mxu0
    %v2196 = vadd.f32 0.0, %v2195
    %v2197 = vpop.f32.mrb[0].mxu0
    %v2198 = vadd.f32 0.0, %v2197
    %2199 = vdwg.mxu0
    %2200 = vmatprep.subr.bf16.mxu0 %v1150
    %2201 = vmatpush1.bf16.msra.mxu0 %v1149
    %2202 = vmatprep.subr.bf16.mxu0 %v1154
    %2203 = vmatpush1.bf16.msra.mxu0 %v1153
    %2204 = vmatprep.subr.bf16.mxu0 %v1158
    %2205 = vmatpush1.bf16.msra.mxu0 %v1157
    %2206 = vmatprep.subr.bf16.mxu0 %v1162
    %2207 = vmatpush1.bf16.msra.mxu0 %v1161
    %2208 = vmatprep.subr.bf16.mxu0 %v1166
    %2209 = vmatpush1.bf16.msra.mxu0 %v1165
    %2210 = vmatprep.subr.bf16.mxu0 %v1170
    %2211 = vmatpush1.bf16.msra.mxu0 %v1169
    %2212 = vmatprep.subr.bf16.mxu0 %v1174
    %2213 = vmatpush1.bf16.msra.mxu0 %v1173
    %2214 = vmatprep.subr.bf16.mxu0 %v1178
    %2215 = vmatpush1.bf16.msra.mxu0 %v1177
    %2216 = vmatprep.subr.bf16.mxu0 %v1182
    %2217 = vmatpush1.bf16.msra.mxu0 %v1181
    %2218 = vmatprep.subr.bf16.mxu0 %v1186
    %2219 = vmatpush1.bf16.msra.mxu0 %v1185
    %2220 = vmatprep.subr.bf16.mxu0 %v1190
    %2221 = vmatpush1.bf16.msra.mxu0 %v1189
    %2222 = vmatprep.subr.bf16.mxu0 %v1194
    %2223 = vmatpush1.bf16.msra.mxu0 %v1193
    %2224 = vmatprep.subr.bf16.mxu0 %v1198
    %2225 = vmatpush1.bf16.msra.mxu0 %v1197
    %2226 = vmatprep.subr.bf16.mxu0 %v1202
    %2227 = vmatpush1.bf16.msra.mxu0 %v1201
    %2228 = vmatprep.subr.bf16.mxu0 %v1206
    %2229 = vmatpush1.bf16.msra.mxu0 %v1205
    %2230 = vmatprep.subr.bf16.mxu0 %v1210
    %2231 = vmatpush1.bf16.msra.mxu0 %v1209
    %2232 = vmatprep.mubr.bf16.mxu0 %v2156
    %2233 = vmatmul.mubr.bf16.gmra.mrb[0].mxu0 %v2155
    %v2234 = vpop.f32.mrb[0].mxu0
    %v2235 = vadd.f32 0.0, %v2234
    %v2236 = vpop.f32.mrb[0].mxu0
    %v2237 = vadd.f32 0.0, %v2236
    %v2238 = vpop.f32.mrb[0].mxu0
    %v2239 = vadd.f32 0.0, %v2238
    %v2240 = vpop.f32.mrb[0].mxu0
    %v2241 = vadd.f32 0.0, %v2240
    %2242 = vdwg.mxu0
    %v2243 = vadd.f32 %v2143, %v2192
    %v2244 = vadd.f32 %v2144, %v2194
    %v2245 = vadd.f32 %v2145, %v2235
    %v2246 = vadd.f32 %v2146, %v2237
    %v2247 = vadd.f32 %v2147, %v2196
    %v2248 = vadd.f32 %v2148, %v2198
    %v2249 = vadd.f32 %v2149, %v2239
    %v2250 = vadd.f32 %v2150, %v2241
    %v2251 = vmul.f32 %v2243, 0.5
    %v2252 = vmul.f32 %v2247, 0.5
    %v2253 = vtanh.pop %v2251
    %v2254 = vtanh.pop %v2252
    %v2255 = vmul.f32 %v2253, 0.5
    %v2256 = vmul.f32 %v2254, 0.5
    %v2257 = vadd.f32 %v2255, 0.5
    %v2258 = vadd.f32 %v2256, 0.5
    %v2259 = vmul.f32 %v2244, 0.5
    %v2260 = vmul.f32 %v2248, 0.5
    %v2261 = vtanh.pop %v2259
    %v2262 = vtanh.pop %v2260
    %v2263 = vmul.f32 %v2261, 0.5
    %v2264 = vmul.f32 %v2262, 0.5
    %v2265 = vadd.f32 %v2263, 0.5
    %v2266 = vadd.f32 %v2264, 0.5
    %v2267 = vtanh.pop %v2245
    %v2268 = vtanh.pop %v2249
    %v2269 = vmul.f32 %v2246, 0.5
    %v2270 = vmul.f32 %v2250, 0.5
    %v2271 = vtanh.pop %v2269
    %v2272 = vtanh.pop %v2270
    %v2273 = vmul.f32 %v2271, 0.5
    %v2274 = vmul.f32 %v2272, 0.5
    %v2275 = vadd.f32 %v2273, 0.5
    %v2276 = vadd.f32 %v2274, 0.5
    %v2277 = vmul.f32 %v2265, %v2137
    %v2278 = vmul.f32 %v2266, %v2138
    %v2279 = vmul.f32 %v2257, %v2267
    %v2280 = vmul.f32 %v2258, %v2268
    %v2281 = vadd.f32 %v2277, %v2279
    %v2282 = vadd.f32 %v2278, %v2280
    %v2283 = vtanh.pop %v2281
    %v2284 = vtanh.pop %v2282
    %v2285 = vmul.f32 %v2275, %v2283
    %v2286 = vmul.f32 %v2276, %v2284
    %v2287 = vld [vmem:[%s944] sm:$0xff]
    %v2288 = vld [vmem:[%s944 + $0x8] sm:$0xff]
    %v2289 = vld [vmem:[%s944 + $0x10] sm:$0xff]
    %v2290 = vld [vmem:[%s944 + $0x18] sm:$0xff]
    %v2291 = vld [vmem:[%s937 + $0x20] sm:$0xff]
    %v2292 = vld [vmem:[%s937 + $0x28] sm:$0xff]
    %v2293 = vld [vmem:[%s937 + $0x30] sm:$0xff]
    %v2294 = vld [vmem:[%s937 + $0x38] sm:$0xff]
    %v2295 = vmul.f32 %v2285, %v931
    %v2296 = vmul.f32 %v2286, %v932
    %v2297 = vmul.f32 %v2285, %v933
    %v2298 = vmul.f32 %v2286, %v934
    %v2299 = vpack.c.bf16 %v2296, %v2295
    %v2300 = vpack.c.bf16 %v2298, %v2297
    %2301 = vmatprep.subr.bf16.mxu0 %v1148
    %2302 = vmatpush1.bf16.msra.mxu0 %v1147
    %2303 = vmatprep.subr.bf16.mxu0 %v1152
    %2304 = vmatpush1.bf16.msra.mxu0 %v1151
    %2305 = vmatprep.subr.bf16.mxu0 %v1156
    %2306 = vmatpush1.bf16.msra.mxu0 %v1155
    %2307 = vmatprep.subr.bf16.mxu0 %v1160
    %2308 = vmatpush1.bf16.msra.mxu0 %v1159
    %2309 = vmatprep.subr.bf16.mxu0 %v1164
    %2310 = vmatpush1.bf16.msra.mxu0 %v1163
    %2311 = vmatprep.subr.bf16.mxu0 %v1168
    %2312 = vmatpush1.bf16.msra.mxu0 %v1167
    %2313 = vmatprep.subr.bf16.mxu0 %v1172
    %2314 = vmatpush1.bf16.msra.mxu0 %v1171
    %2315 = vmatprep.subr.bf16.mxu0 %v1176
    %2316 = vmatpush1.bf16.msra.mxu0 %v1175
    %2317 = vmatprep.subr.bf16.mxu0 %v1180
    %2318 = vmatpush1.bf16.msra.mxu0 %v1179
    %2319 = vmatprep.subr.bf16.mxu0 %v1184
    %2320 = vmatpush1.bf16.msra.mxu0 %v1183
    %2321 = vmatprep.subr.bf16.mxu0 %v1188
    %2322 = vmatpush1.bf16.msra.mxu0 %v1187
    %2323 = vmatprep.subr.bf16.mxu0 %v1192
    %2324 = vmatpush1.bf16.msra.mxu0 %v1191
    %2325 = vmatprep.subr.bf16.mxu0 %v1196
    %2326 = vmatpush1.bf16.msra.mxu0 %v1195
    %2327 = vmatprep.subr.bf16.mxu0 %v1200
    %2328 = vmatpush1.bf16.msra.mxu0 %v1199
    %2329 = vmatprep.subr.bf16.mxu0 %v1204
    %2330 = vmatpush1.bf16.msra.mxu0 %v1203
    %2331 = vmatprep.subr.bf16.mxu0 %v1208
    %2332 = vmatpush1.bf16.msra.mxu0 %v1207
    %2333 = vmatprep.mubr.bf16.mxu0 %v2300
    %2334 = vmatmul.mubr.bf16.gmra.mrb[0].mxu0 %v2299
    %v2335 = vpop.f32.mrb[0].mxu0
    %v2336 = vadd.f32 0.0, %v2335
    %v2337 = vpop.f32.mrb[0].mxu0
    %v2338 = vadd.f32 0.0, %v2337
    %v2339 = vpop.f32.mrb[0].mxu0
    %v2340 = vadd.f32 0.0, %v2339
    %v2341 = vpop.f32.mrb[0].mxu0
    %v2342 = vadd.f32 0.0, %v2341
    %2343 = vdwg.mxu0
    %2344 = vmatprep.subr.bf16.mxu0 %v1150
    %2345 = vmatpush1.bf16.msra.mxu0 %v1149
    %2346 = vmatprep.subr.bf16.mxu0 %v1154
    %2347 = vmatpush1.bf16.msra.mxu0 %v1153
    %2348 = vmatprep.subr.bf16.mxu0 %v1158
    %2349 = vmatpush1.bf16.msra.mxu0 %v1157
    %2350 = vmatprep.subr.bf16.mxu0 %v1162
    %2351 = vmatpush1.bf16.msra.mxu0 %v1161
    %2352 = vmatprep.subr.bf16.mxu0 %v1166
    %2353 = vmatpush1.bf16.msra.mxu0 %v1165
    %2354 = vmatprep.subr.bf16.mxu0 %v1170
    %2355 = vmatpush1.bf16.msra.mxu0 %v1169
    %2356 = vmatprep.subr.bf16.mxu0 %v1174
    %2357 = vmatpush1.bf16.msra.mxu0 %v1173
    %2358 = vmatprep.subr.bf16.mxu0 %v1178
    %2359 = vmatpush1.bf16.msra.mxu0 %v1177
    %2360 = vmatprep.subr.bf16.mxu0 %v1182
    %2361 = vmatpush1.bf16.msra.mxu0 %v1181
    %2362 = vmatprep.subr.bf16.mxu0 %v1186
    %2363 = vmatpush1.bf16.msra.mxu0 %v1185
    %2364 = vmatprep.subr.bf16.mxu0 %v1190
    %2365 = vmatpush1.bf16.msra.mxu0 %v1189
    %2366 = vmatprep.subr.bf16.mxu0 %v1194
    %2367 = vmatpush1.bf16.msra.mxu0 %v1193
    %2368 = vmatprep.subr.bf16.mxu0 %v1198
    %2369 = vmatpush1.bf16.msra.mxu0 %v1197
    %2370 = vmatprep.subr.bf16.mxu0 %v1202
    %2371 = vmatpush1.bf16.msra.mxu0 %v1201
    %2372 = vmatprep.subr.bf16.mxu0 %v1206
    %2373 = vmatpush1.bf16.msra.mxu0 %v1205
    %2374 = vmatprep.subr.bf16.mxu0 %v1210
    %2375 = vmatpush1.bf16.msra.mxu0 %v1209
    %2376 = vmatprep.mubr.bf16.mxu0 %v2300
    %2377 = vmatmul.mubr.bf16.gmra.mrb[0].mxu0 %v2299
    %v2378 = vpop.f32.mrb[0].mxu0
    %v2379 = vadd.f32 0.0, %v2378
    %v2380 = vpop.f32.mrb[0].mxu0
    %v2381 = vadd.f32 0.0, %v2380
    %v2382 = vpop.f32.mrb[0].mxu0
    %v2383 = vadd.f32 0.0, %v2382
    %v2384 = vpop.f32.mrb[0].mxu0
    %v2385 = vadd.f32 0.0, %v2384
    %2386 = vdwg.mxu0
    %v2387 = vadd.f32 %v2287, %v2336
    %v2388 = vadd.f32 %v2288, %v2338
    %v2389 = vadd.f32 %v2289, %v2379
    %v2390 = vadd.f32 %v2290, %v2381
    %v2391 = vadd.f32 %v2291, %v2340
    %v2392 = vadd.f32 %v2292, %v2342
    %v2393 = vadd.f32 %v2293, %v2383
    %v2394 = vadd.f32 %v2294, %v2385
    %v2395 = vmul.f32 %v2387, 0.5
    %v2396 = vmul.f32 %v2391, 0.5
    %v2397 = vtanh.pop %v2395
    %v2398 = vtanh.pop %v2396
    %v2399 = vmul.f32 %v2397, 0.5
    %v2400 = vmul.f32 %v2398, 0.5
    %v2401 = vadd.f32 %v2399, 0.5
    %v2402 = vadd.f32 %v2400, 0.5
    %v2403 = vmul.f32 %v2388, 0.5
    %v2404 = vmul.f32 %v2392, 0.5
    %v2405 = vtanh.pop %v2403
    %v2406 = vtanh.pop %v2404
    %v2407 = vmul.f32 %v2405, 0.5
    %v2408 = vmul.f32 %v2406, 0.5
    %v2409 = vadd.f32 %v2407, 0.5
    %v2410 = vadd.f32 %v2408, 0.5
    %v2411 = vtanh.pop %v2389
    %v2412 = vtanh.pop %v2393
    %v2413 = vmul.f32 %v2390, 0.5
    %v2414 = vmul.f32 %v2394, 0.5
    %v2415 = vtanh.pop %v2413
    %v2416 = vtanh.pop %v2414
    %v2417 = vmul.f32 %v2415, 0.5
    %v2418 = vmul.f32 %v2416, 0.5
    %v2419 = vadd.f32 %v2417, 0.5
    %v2420 = vadd.f32 %v2418, 0.5
    %v2421 = vmul.f32 %v2409, %v2281
    %v2422 = vmul.f32 %v2410, %v2282
    %v2423 = vmul.f32 %v2401, %v2411
    %v2424 = vmul.f32 %v2402, %v2412
    %v2425 = vadd.f32 %v2421, %v2423
    %v2426 = vadd.f32 %v2422, %v2424
    %v2427 = vtanh.pop %v2425
    %v2428 = vtanh.pop %v2426
    %v2429 = vmul.f32 %v2419, %v2427
    %v2430 = vmul.f32 %v2420, %v2428
    %2431 = vst [vmem:[%s4] sm:$0xff] %v2429
    %2432 = vst [vmem:[%s4 + $0x8] sm:$0xff] %v2430
    // Predicated region
    $region26: #{midi_encoder_forward.1} parent=1 // pred_check
      _
    $region27: #{midi_encoder_forward.1} parent=1 // pred_check_branch
      %2434 = sbr.rel (0) target = $region29
    $region28: #{midi_encoder_forward.1} parent=1 // pred_region
      _
    $region29: #{midi_encoder_forward.1} parent=1 // pred_fallthru
      _
    // Predicated region
    $region30: #{midi_encoder_forward.1} parent=1 // pred_check
      _
    $region31: #{midi_encoder_forward.1} parent=1 // pred_check_branch
      %2436 = sbr.rel (0) target = $region33
    $region32: #{midi_encoder_forward.1} parent=1 // pred_region
      _
    $region33: #{midi_encoder_forward.1} parent=1 // pred_fallthru
      _
    %2437 = vsyncpa [#allocation4], 1
    %2438 = vsyncpa [#allocation6], 1

</llo_original>
